<compile_context>
chip_gen: v6e
topology: v6e:2x2x1
jax: 0.10.0
libtpu: 0.0.40
codegen_flags: <defaults>
</compile_context>

<pallas_src>
import functools

import jax
import jax.numpy as jnp
from jax import lax
from jax.experimental import pallas as pl
from jax.experimental.pallas import tpu as pltpu


def _log1p_stable(t):
    """log(1+t) for t in [0,1] using only log/div; no NaN in the discarded branch."""
    u = 1.0 + t
    d = jnp.where(u == 1.0, 1.0, u - 1.0)
    return jnp.where(u == 1.0, t, jnp.log(u) * (t / d))


def _dsl_kernel(ids_ref, aux_ref, logits_ref, x_ref, y_ref, lp1_ref, lp0_ref,
                out_ref, ce_acc, lp_acc, *, seq_len, needs_mask, outputs_are_argmax):
    p = pl.program_id(1)
    s = pl.program_id(2)
    n_inner = pl.num_programs(2)

    @pl.when(s == 0)
    def _init():
        ce_acc[...] = jnp.zeros_like(ce_acc)
        lp_acc[...] = jnp.zeros_like(lp_acc)

    logits = logits_ref[...].astype(jnp.float32)      # [1, TS, V]  (bf16 -> f32 in vregs)
    ids = ids_ref[...]                                # [1, TS, 1 or 2]  int32
    aux = aux_ref[...]                                # [1, TS, 2]  f32 (w[tgt], lm[tgt])
    _, TS, V = logits.shape

    w_t = aux[:, :, 0:1]                              # [1, TS, 1]
    lm_t = aux[:, :, 1:2]                             # [1, TS, 1]
    tgt = ids[:, :, 0:1]                              # [1, TS, 1]
    zero = jnp.float32(0.0)

    # One log-sum-exp per token, reused by the CE term and log p(y|x).
    m = jnp.max(logits, axis=-1, keepdims=True)                     # [1, TS, 1]
    z = jnp.sum(jnp.exp(logits - m), axis=-1, keepdims=True)        # [1, TS, 1]
    log_z = m + jnp.log(z)                                          # [1, TS, 1]

    v_iota = lax.broadcasted_iota(jnp.int32, (1, 1, V), 2)          # broadcast in compares
    tgt_mask = v_iota == tgt                                        # [1, TS, V]
    logit_t = jnp.sum(jnp.where(tgt_mask, logits, zero), axis=-1, keepdims=True)

    if outputs_are_argmax:
        logit_o = m                                   # decoded token == argmax(logits)
    else:
        out_mask = v_iota == ids[:, :, 1:2]
        logit_o = jnp.sum(jnp.where(out_mask, logits, zero), axis=-1, keepdims=True)

    ce_tok = w_t * (log_z - logit_t)                  # weighted CE(sum) per token
    lp_tok = lm_t + (logit_o - log_z)                 # log p(x) + log p(y|x) per token

    if needs_mask:  # tail block may extend past the true sequence length
        base = (p * n_inner + s) * TS
        tok = base + lax.broadcasted_iota(jnp.int32, (1, TS, 1), 1)
        valid = tok < seq_len
        ce_tok = jnp.where(valid, ce_tok, zero)
        lp_tok = jnp.where(valid, lp_tok, zero)

    ce_acc[...] += ce_tok
    lp_acc[...] += lp_tok

    @pl.when(s == n_inner - 1)
    def _finalize():
        x = x_ref[0].astype(jnp.float32)      # [1, A] NLU logits for this batch row
        y = y_ref[0].astype(jnp.float32)      # [1, A] NLU targets (0/1)
        lp1 = lp1_ref[...]                    # [1, A] log p(attr=1) under MADE stand-in
        lp0 = lp0_ref[...]                    # [1, A] log p(attr=0)

        # softplus(-|x|) = log(1+exp(-|x|)), shared by BCE and log p(x|y).
        sp = _log1p_stable(jnp.exp(-jnp.abs(x)))
        bce = jnp.sum(jnp.maximum(x, zero) - x * y + sp)        # BCEWithLogits(sum)
        log_p_x_y = -jnp.sum(sp)                                # decisions = (sigmoid(x) >= .5)
        log_p_y = jnp.sum(y * lp1 + (1.0 - y) * lp0)            # MADE stand-in

        ce = jnp.sum(ce_acc[...])             # CE partial over this (b, split) slice
        lp = jnp.sum(lp_acc[...])             # log p(x)+log p(y|x) partial, same slice
        nlu_sub = log_p_y + log_p_x_y

        lane = lax.broadcasted_iota(jnp.int32, (8, 128), 1)
        vals = jnp.where(lane == 0, ce,
               jnp.where(lane == 1, lp,
               jnp.where(lane == 2, bce,
               jnp.where(lane == 3, nlu_sub, zero))))            # (8, 128)
        out_ref[...] = vals[None, None]                          # (1, 1, 8, 128)


def _tpu_vmem_bytes(default=64 * 1024 * 1024):
    try:
        info = pltpu.get_tpu_info()
        return int(getattr(info, "vmem_capacity_bytes", default)) or default
    except Exception:
        return default


def _pick_seq_tile(S, V, itemsize, tile_budget_bytes):
    """Largest seq tile whose logits block fits the budget; prefers exact divisors."""
    step = 16 if itemsize < 4 else 8          # bf16 vregs are (16, 128)
    cap = max(step, tile_budget_bytes // max(1, V * itemsize))
    if cap >= S:
        return S                              # whole sequence in one block
    divisors = [ts for ts in range(step, cap + 1, step) if S % ts == 0]
    if divisors:
        return max(divisors)
    return max(step, (cap // step) * step)    # non-divisor -> masked tail block


def dsl_criterion_forward(nlg_logits, nlg_outputs, nlu_logits, nlg_targets, nlu_targets,
                          loss_weight, lm_unigram_logp, made_p,
                          lambda_xy=0.1, lambda_yx=0.1,
                          pretrain_epochs=0, epoch=0,
                          seq_tile=None, seq_split=None, outputs_are_argmax=False):
    B, S, V = nlg_logits.shape
    _, A = nlu_logits.shape

    nlg_targets = nlg_targets.astype(jnp.int32)
    if outputs_are_argmax:
        ids = nlg_targets[..., None]                              # [B, S, 1]
    else:
        # Decoded word-ids: accept indices [B,S] (preferred) or one-hot [B,S,V].
        # TODO(synk): the one-hot path costs a second full [B,S,V] HBM read in XLA;
        #             callers should pass indices.
        out_idx = jnp.argmax(nlg_outputs, axis=-1) if nlg_outputs.ndim == 3 else nlg_outputs
        ids = jnp.stack([nlg_targets, out_idx.astype(jnp.int32)], axis=-1)   # [B, S, 2]

    # Hoisted per-token gathers: w[tgt] and lm[tgt] become a tiny packed stream.
    loss_weight = loss_weight.astype(jnp.float32)
    lm_unigram_logp = lm_unigram_logp.astype(jnp.float32)
    aux = jnp.stack([loss_weight[nlg_targets], lm_unigram_logp[nlg_targets]], axis=-1)

    made_p = made_p.astype(jnp.float32)
    lp1 = jnp.log(made_p).reshape(1, A)
    lp0 = jnp.log1p(-made_p).reshape(1, A)

    x = nlu_logits.reshape(B, 1, A)    # NLU tensors stay in native dtype
    y = nlu_targets.reshape(B, 1, A)

    # Generation-aware VMEM budget / tile sizing (v5e/v6e 128 MiB, v7x 64 MiB).
    vmem_cap = _tpu_vmem_bytes()
    vmem_limit = max(32 * 1024 * 1024, min(96 * 1024 * 1024, int(vmem_cap * 0.75)))
    if seq_tile is None:
        seq_tile = _pick_seq_tile(S, V, nlg_logits.dtype.itemsize, vmem_limit // 8)
    assert seq_tile == S or seq_tile % 8 == 0, (S, seq_tile)

    n_blocks = pl.cdiv(S, seq_tile)
    needs_mask = (S % seq_tile) != 0
    if seq_split is None:              # feed both v7x TensorCores even when B == 1
        seq_split = 2 if (B == 1 and n_blocks % 2 == 0) else 1
    if n_blocks % seq_split != 0:
        seq_split = 1
    n_inner = n_blocks // seq_split
    nid = ids.shape[-1]

    kernel = functools.partial(_dsl_kernel, seq_len=S, needs_mask=needs_mask,
                               outputs_are_argmax=outputs_are_argmax)

    in_specs = [
        pl.BlockSpec((1, seq_tile, nid), lambda b, p, s: (b, p * n_inner + s, 0)),  # ids
        pl.BlockSpec((1, seq_tile, 2), lambda b, p, s: (b, p * n_inner + s, 0)),    # w_t, lm_t
        pl.BlockSpec((1, seq_tile, V), lambda b, p, s: (b, p * n_inner + s, 0)),    # logits
        pl.BlockSpec((1, 1, A), lambda b, p, s: (b, 0, 0)),                         # nlu logits
        pl.BlockSpec((1, 1, A), lambda b, p, s: (b, 0, 0)),                         # nlu targets
        pl.BlockSpec((1, A), lambda b, p, s: (0, 0)),                               # MADE log p(1)
        pl.BlockSpec((1, A), lambda b, p, s: (0, 0)),                               # MADE log p(0)
    ]
    out_specs = pl.BlockSpec((1, 1, 8, 128), lambda b, p, s: (b, p, 0, 0))
    out_shape = jax.ShapeDtypeStruct((B, seq_split, 8, 128), jnp.float32)

    partials = pl.pallas_call(
        kernel,
        grid=(B, seq_split, n_inner),
        in_specs=in_specs,
        out_specs=out_specs,
        out_shape=out_shape,
        scratch_shapes=[pltpu.VMEM((1, seq_tile, 1), jnp.float32),   # CE accumulator
                        pltpu.VMEM((1, seq_tile, 1), jnp.float32)],  # log p(x)+log p(y|x)
        compiler_params=pltpu.CompilerParams(
            dimension_semantics=("parallel", "parallel", "arbitrary"),
            vmem_limit_bytes=vmem_limit),
    )(ids, aux, nlg_logits, x, y, lp1, lp0)

    # Tiny O(B) finish: sums, per-batch dual residual, lambda scheduling.
    nlg_sup = jnp.sum(partials[:, :, 0, 0])
    nlu_sup = jnp.sum(partials[:, 0, 0, 2])                 # identical across splits
    dvec = jnp.sum(partials[:, :, 0, 1], axis=1) - partials[:, 0, 0, 3]
    dual = jnp.mean(dvec * dvec)                            # mean over the local batch

    sched = 0.0 if epoch < pretrain_epochs else 1.0
    nlg_loss_dual = lambda_xy * sched * dual
    nlu_loss_dual = lambda_yx * sched * dual
    return nlg_sup + nlg_loss_dual, nlu_sup + nlu_loss_dual, nlg_loss_dual


def _reference(nlg_logits_f32, out_idx, nlu_logits, nlg_targets, nlu_targets,
               loss_weight, lm_unigram_logp, made_p, lambda_xy=0.1, lambda_yx=0.1):
    logp = jax.nn.log_softmax(nlg_logits_f32, axis=-1)
    logp_t = jnp.take_along_axis(logp, nlg_targets[..., None], axis=-1)[..., 0]
    w_t = loss_weight[nlg_targets]
    ce = jnp.sum(w_t * (-logp_t))
    x, y = nlu_logits, nlu_targets
    bce = jnp.sum(jnp.maximum(x, 0.0) - x * y + jnp.log1p(jnp.exp(-jnp.abs(x))))
    logp_o = jnp.take_along_axis(logp, out_idx[..., None], axis=-1)[..., 0]
    log_p_y_x = jnp.sum(logp_o, axis=-1)
    p = jax.nn.sigmoid(x)
    d = (p >= 0.5).astype(jnp.float32)
    log_p_x_y = jnp.sum(jnp.log(p * d + (1 - p) * (1 - d)), axis=-1)
    log_p_x = jnp.sum(lm_unigram_logp[nlg_targets], axis=-1)
    log_p_y = jnp.sum(y * jnp.log(made_p) + (1 - y) * jnp.log1p(-made_p), axis=-1)
    dvec = log_p_x + log_p_y_x - log_p_y - log_p_x_y
    dual = jnp.mean(dvec ** 2)
    return ce + lambda_xy * dual, bce + lambda_yx * dual, lambda_xy * dual


if __name__ == "__main__":
    B, S, V, A = 2, 256, 128, 16
    key = jax.random.PRNGKey(0)
    k1, k2, k3, k4, k5, k6, k7 = jax.random.split(key, 7)

    nlg_logits_f32 = jax.random.normal(k1, (B, S, V), dtype=jnp.float32)
    nlg_logits = nlg_logits_f32.astype(jnp.bfloat16)          # model's native dtype
    nlg_logits_ref = nlg_logits.astype(jnp.float32)           # identical values for reference
    out_idx = jnp.argmax(nlg_logits_ref, axis=-1)             # decoded word-ids (indices)
    nlu_logits = jax.random.normal(k2, (B, A), dtype=jnp.float32)
    nlg_targets = jax.random.randint(k3, (B, S), 0, V)
    nlu_targets = jax.random.bernoulli(k4, 0.5, (B, A)).astype(jnp.float32)

    # deterministic "parameters" for the criterion and the synthetic LM / MADE
    loss_weight = 0.5 + jax.random.uniform(k5, (V,), dtype=jnp.float32)
    lm_unigram_logp = jax.nn.log_softmax(jax.random.normal(k6, (V,), dtype=jnp.float32))
    made_p = jnp.clip(jax.nn.sigmoid(jax.random.normal(k7, (A,), dtype=jnp.float32)),
                      1e-4, 1.0 - 1e-4)

    ref = _reference(nlg_logits_ref, out_idx, nlu_logits, nlg_targets, nlu_targets,
                     loss_weight, lm_unigram_logp, made_p)

    def check(out):
        for got, want in zip(out, ref):
            assert jnp.allclose(got, want, rtol=1e-3, atol=1e-2), (got, want)
        # the dual dominates; check CE / BCE alone too (lambda_xy == lambda_yx here)
        assert jnp.allclose(out[0] - out[2], ref[0] - ref[2], rtol=1e-3, atol=1e-2)
        assert jnp.allclose(out[1] - out[2], ref[1] - ref[2], rtol=1e-3, atol=1e-2)

    # 1) general path: decoded ids streamed, 2 seq tiles -> exercises accumulation
    out1 = jax.block_until_ready(dsl_criterion_forward(
        nlg_logits, out_idx, nlu_logits, nlg_targets, nlu_targets,
        loss_weight, lm_unigram_logp, made_p, seq_tile=128))
    check(out1)

    # 2) decoded == argmax(logits) fast path + seq_split (v7x megacore) path
    out2 = jax.block_until_ready(dsl_criterion_forward(
        nlg_logits, None, nlu_logits, nlg_targets, nlu_targets,
        loss_weight, lm_unigram_logp, made_p, seq_tile=128, seq_split=2,
        outputs_are_argmax=True))
    check(out2)

    # 3) non-dividing seq_tile -> masked tail block
    out3 = jax.block_until_ready(dsl_criterion_forward(
        nlg_logits, out_idx, nlu_logits, nlg_targets, nlu_targets,
        loss_weight, lm_unigram_logp, made_p, seq_tile=96))
    check(out3)

    print("KERNEL_OK")
</pallas_src>

<mosaic_0001>
module attributes {stable_mosaic.version = 11 : i64} {
  func.func @_dsl_kernel(%arg0: i32, %arg1: i32, %arg2: i32, %arg3: memref<1x128x2xi32, #tpu.memory_space<vmem>>, %arg4: memref<1x128x2xf32, #tpu.memory_space<vmem>>, %arg5: memref<1x128x128xbf16, #tpu.memory_space<vmem>>, %arg6: memref<1x1x16xf32, #tpu.memory_space<vmem>>, %arg7: memref<1x1x16xf32, #tpu.memory_space<vmem>>, %arg8: memref<1x16xf32, #tpu.memory_space<vmem>>, %arg9: memref<1x16xf32, #tpu.memory_space<vmem>>, %arg10: memref<1x1x8x128xf32, #tpu.memory_space<vmem>>, %arg11: memref<1x128x1xf32, #tpu.memory_space<vmem>>, %arg12: memref<1x128x1xf32, #tpu.memory_space<vmem>>) attributes {dimension_semantics = [#tpu.dimension_semantics<parallel>, #tpu.dimension_semantics<parallel>, #tpu.dimension_semantics<arbitrary>], iteration_bounds = array<i64: 2, 1, 2>, scalar_prefetch = 0 : i64, scratch_operands = 2 : i64, tpu.core_type = #tpu.core_type<tc>, window_params = [{transform_indices = @transform_0, window_bounds = array<i64: 1, 128, 2>}, {transform_indices = @transform_1, window_bounds = array<i64: 1, 128, 2>}, {transform_indices = @transform_2, window_bounds = array<i64: 1, 128, 128>}, {transform_indices = @transform_3, window_bounds = array<i64: 1, 1, 16>}, {transform_indices = @transform_4, window_bounds = array<i64: 1, 1, 16>}, {pipeline_mode = #tpu.pipeline_mode<synchronous>, transform_indices = @transform_5, window_bounds = array<i64: 1, 16>}, {pipeline_mode = #tpu.pipeline_mode<synchronous>, transform_indices = @transform_6, window_bounds = array<i64: 1, 16>}, {transform_indices = @transform_7, window_bounds = array<i64: 1, 1, 8, 128>}]} {
    %c0_i32 = arith.constant 0 : i32
    %0 = arith.cmpi eq, %arg2, %c0_i32 : i32
    %1 = arith.extui %0 : i1 to i32
    %c0_i32_0 = arith.constant 0 : i32
    %2 = arith.cmpi ne, %1, %c0_i32_0 : i32
    scf.if %2 {
      %cst_28 = arith.constant 0.000000e+00 : f32
      %48 = vector.broadcast %cst_28 : f32 to vector<1x128x1xf32>
      %c0_29 = arith.constant 0 : index
      %c0_30 = arith.constant 0 : index
      %c0_31 = arith.constant 0 : index
      %49 = vector.load %arg11[%c0_29, %c0_30, %c0_31] : memref<1x128x1xf32, #tpu.memory_space<vmem>>, vector<1x128x1xf32>
      tpu.vector_store %arg11[%c0_29, %c0_30, %c0_31], %48 {strides = array<i32>} : memref<1x128x1xf32, #tpu.memory_space<vmem>>, vector<1x128x1xf32>,
      %cst_32 = arith.constant 0.000000e+00 : f32
      %50 = vector.broadcast %cst_32 : f32 to vector<1x128x1xf32>
      %c0_33 = arith.constant 0 : index
      %c0_34 = arith.constant 0 : index
      %c0_35 = arith.constant 0 : index
      %51 = vector.load %arg12[%c0_33, %c0_34, %c0_35] : memref<1x128x1xf32, #tpu.memory_space<vmem>>, vector<1x128x1xf32>
      tpu.vector_store %arg12[%c0_33, %c0_34, %c0_35], %50 {strides = array<i32>} : memref<1x128x1xf32, #tpu.memory_space<vmem>>, vector<1x128x1xf32>,
    } else {
    }
    %c0 = arith.constant 0 : index
    %c0_1 = arith.constant 0 : index
    %c0_2 = arith.constant 0 : index
    %3 = vector.load %arg5[%c0, %c0_1, %c0_2] : memref<1x128x128xbf16, #tpu.memory_space<vmem>>, vector<1x128x128xbf16>
    %4 = arith.extf %3 : vector<1x128x128xbf16> to vector<1x128x128xf32>
    %c0_3 = arith.constant 0 : index
    %c0_4 = arith.constant 0 : index
    %c0_5 = arith.constant 0 : index
    %5 = vector.load %arg3[%c0_3, %c0_4, %c0_5] : memref<1x128x2xi32, #tpu.memory_space<vmem>>, vector<1x128x2xi32>
    %c0_6 = arith.constant 0 : index
    %c0_7 = arith.constant 0 : index
    %c0_8 = arith.constant 0 : index
    %6 = vector.load %arg4[%c0_6, %c0_7, %c0_8] : memref<1x128x2xf32, #tpu.memory_space<vmem>>, vector<1x128x2xf32>
    %7 = vector.extract_strided_slice %6 {offsets = [0, 0, 0], sizes = [1, 128, 1], strides = [1, 1, 1]} : vector<1x128x2xf32> to vector<1x128x1xf32>
    %8 = vector.extract_strided_slice %6 {offsets = [0, 0, 1], sizes = [1, 128, 1], strides = [1, 1, 1]} : vector<1x128x2xf32> to vector<1x128x1xf32>
    %9 = vector.extract_strided_slice %5 {offsets = [0, 0, 0], sizes = [1, 128, 1], strides = [1, 1, 1]} : vector<1x128x2xi32> to vector<1x128x1xi32>
    %cst = arith.constant dense<0xFF800000> : vector<1x128xf32>
    %10 = vector.multi_reduction <maximumf>, %4, %cst [2] : vector<1x128x128xf32> to vector<1x128xf32>
    %11 = vector.shape_cast %10 : vector<1x128xf32> to vector<1x128x1xf32>
    %12 = vector.broadcast %11 : vector<1x128x1xf32> to vector<1x128x128xf32>
    %13 = arith.subf %4, %12 : vector<1x128x128xf32>
    %14 = math.exp %13 : vector<1x128x128xf32>
    %cst_9 = arith.constant dense<0.000000e+00> : vector<1x128xf32>
    %15 = vector.multi_reduction <add>, %14, %cst_9 [2] : vector<1x128x128xf32> to vector<1x128xf32>
    %16 = vector.shape_cast %15 : vector<1x128xf32> to vector<1x128x1xf32>
    %17 = math.log %16 : vector<1x128x1xf32>
    %18 = arith.addf %11, %17 : vector<1x128x1xf32>
    %19 = tpu.iota {dimensions = array<i32: 2>} : vector<1x1x128xi32>
    %20 = vector.broadcast %19 : vector<1x1x128xi32> to vector<1x128x128xi32>
    %21 = vector.broadcast %9 : vector<1x128x1xi32> to vector<1x128x128xi32>
    %22 = arith.cmpi eq, %20, %21 : vector<1x128x128xi32>
    %cst_10 = arith.constant 0.000000e+00 : f32
    %23 = vector.broadcast %cst_10 : f32 to vector<1x128x128xf32>
    %24 = arith.select %22, %4, %23 : vector<1x128x128xi1>, vector<1x128x128xf32>
    %cst_11 = arith.constant dense<0.000000e+00> : vector<1x128xf32>
    %25 = vector.multi_reduction <add>, %24, %cst_11 [2] : vector<1x128x128xf32> to vector<1x128xf32>
    %26 = vector.shape_cast %25 : vector<1x128xf32> to vector<1x128x1xf32>
    %27 = vector.extract_strided_slice %5 {offsets = [0, 0, 1], sizes = [1, 128, 1], strides = [1, 1, 1]} : vector<1x128x2xi32> to vector<1x128x1xi32>
    %28 = vector.broadcast %19 : vector<1x1x128xi32> to vector<1x128x128xi32>
    %29 = vector.broadcast %27 : vector<1x128x1xi32> to vector<1x128x128xi32>
    %30 = arith.cmpi eq, %28, %29 : vector<1x128x128xi32>
    %cst_12 = arith.constant 0.000000e+00 : f32
    %31 = vector.broadcast %cst_12 : f32 to vector<1x128x128xf32>
    %32 = arith.select %30, %4, %31 : vector<1x128x128xi1>, vector<1x128x128xf32>
    %cst_13 = arith.constant dense<0.000000e+00> : vector<1x128xf32>
    %33 = vector.multi_reduction <add>, %32, %cst_13 [2] : vector<1x128x128xf32> to vector<1x128xf32>
    %34 = vector.shape_cast %33 : vector<1x128xf32> to vector<1x128x1xf32>
    %35 = arith.subf %18, %26 : vector<1x128x1xf32>
    %36 = arith.mulf %7, %35 : vector<1x128x1xf32>
    %37 = arith.subf %34, %18 : vector<1x128x1xf32>
    %38 = arith.addf %8, %37 : vector<1x128x1xf32>
    %c0_14 = arith.constant 0 : index
    %c0_15 = arith.constant 0 : index
    %c0_16 = arith.constant 0 : index
    %39 = vector.load %arg11[%c0_14, %c0_15, %c0_16] : memref<1x128x1xf32, #tpu.memory_space<vmem>>, vector<1x128x1xf32>
    %40 = arith.addf %39, %36 : vector<1x128x1xf32>
    %c0_17 = arith.constant 0 : index
    %c0_18 = arith.constant 0 : index
    %c0_19 = arith.constant 0 : index
    %41 = vector.load %arg11[%c0_17, %c0_18, %c0_19] : memref<1x128x1xf32, #tpu.memory_space<vmem>>, vector<1x128x1xf32>
    tpu.vector_store %arg11[%c0_17, %c0_18, %c0_19], %40 {strides = array<i32>} : memref<1x128x1xf32, #tpu.memory_space<vmem>>, vector<1x128x1xf32>,
    %c0_20 = arith.constant 0 : index
    %c0_21 = arith.constant 0 : index
    %c0_22 = arith.constant 0 : index
    %42 = vector.load %arg12[%c0_20, %c0_21, %c0_22] : memref<1x128x1xf32, #tpu.memory_space<vmem>>, vector<1x128x1xf32>
    %43 = arith.addf %42, %38 : vector<1x128x1xf32>
    %c0_23 = arith.constant 0 : index
    %c0_24 = arith.constant 0 : index
    %c0_25 = arith.constant 0 : index
    %44 = vector.load %arg12[%c0_23, %c0_24, %c0_25] : memref<1x128x1xf32, #tpu.memory_space<vmem>>, vector<1x128x1xf32>
    tpu.vector_store %arg12[%c0_23, %c0_24, %c0_25], %43 {strides = array<i32>} : memref<1x128x1xf32, #tpu.memory_space<vmem>>, vector<1x128x1xf32>,
    %c1_i32 = arith.constant 1 : i32
    %45 = arith.cmpi eq, %arg2, %c1_i32 : i32
    %46 = arith.extui %45 : i1 to i32
    %cst_26 = arith.constant 0.000000e+00 : f32
    %c0_i32_27 = arith.constant 0 : i32
    %47 = arith.cmpi ne, %46, %c0_i32_27 : i32
    scf.if %47 {
      %c0_28 = arith.constant 0 : index
      %c0_29 = arith.constant 0 : index
      %c0_30 = arith.constant 0 : index
      %48 = vector.load %arg6[%c0_28, %c0_29, %c0_30] : memref<1x1x16xf32, #tpu.memory_space<vmem>>, vector<1x1x16xf32>
      %49 = vector.shape_cast %48 : vector<1x1x16xf32> to vector<1x16xf32>
      %c0_31 = arith.constant 0 : index
      %c0_32 = arith.constant 0 : index
      %c0_33 = arith.constant 0 : index
      %50 = vector.load %arg7[%c0_31, %c0_32, %c0_33] : memref<1x1x16xf32, #tpu.memory_space<vmem>>, vector<1x1x16xf32>
      %51 = vector.shape_cast %50 : vector<1x1x16xf32> to vector<1x16xf32>
      %c0_34 = arith.constant 0 : index
      %c0_35 = arith.constant 0 : index
      %52 = vector.load %arg8[%c0_34, %c0_35] : memref<1x16xf32, #tpu.memory_space<vmem>>, vector<1x16xf32>
      %c0_36 = arith.constant 0 : index
      %c0_37 = arith.constant 0 : index
      %53 = vector.load %arg9[%c0_36, %c0_37] : memref<1x16xf32, #tpu.memory_space<vmem>>, vector<1x16xf32>
      %54 = math.absf %49 : vector<1x16xf32>
      %cst_38 = arith.constant 0.000000e+00 : f32
      %55 = vector.broadcast %cst_38 : f32 to vector<1x16xf32>
      %56 = arith.subf %55, %54 : vector<1x16xf32>
      %57 = math.exp %56 : vector<1x16xf32>
      %cst_39 = arith.constant 1.000000e+00 : f32
      %58 = vector.broadcast %cst_39 : f32 to vector<1x16xf32>
      %59 = arith.addf %58, %57 : vector<1x16xf32>
      %cst_40 = arith.constant 1.000000e+00 : f32
      %60 = vector.broadcast %cst_40 : f32 to vector<1x16xf32>
      %61 = arith.cmpf oeq, %59, %60 : vector<1x16xf32>
      %cst_41 = arith.constant 1.000000e+00 : f32
      %62 = vector.broadcast %cst_41 : f32 to vector<1x16xf32>
      %63 = arith.subf %59, %62 : vector<1x16xf32>
      %cst_42 = arith.constant 1.000000e+00 : f32
      %64 = vector.broadcast %cst_42 : f32 to vector<1x16xf32>
      %65 = arith.select %61, %64, %63 : vector<1x16xi1>, vector<1x16xf32>
      %cst_43 = arith.constant 1.000000e+00 : f32
      %66 = vector.broadcast %cst_43 : f32 to vector<1x16xf32>
      %67 = arith.cmpf oeq, %59, %66 : vector<1x16xf32>
      %68 = math.log %59 : vector<1x16xf32>
      %69 = arith.divf %57, %65 : vector<1x16xf32>
      %70 = arith.mulf %68, %69 : vector<1x16xf32>
      %71 = arith.select %67, %57, %70 : vector<1x16xi1>, vector<1x16xf32>
      %72 = vector.broadcast %cst_26 : f32 to vector<1x16xf32>
      %73 = arith.maximumf %49, %72 : vector<1x16xf32>
      %74 = arith.mulf %49, %51 : vector<1x16xf32>
      %75 = arith.subf %73, %74 : vector<1x16xf32>
      %76 = arith.addf %75, %71 : vector<1x16xf32>
      %77 = vector.shape_cast %76 : vector<1x16xf32> to vector<1x1x16xf32>
      %cst_44 = arith.constant dense<0.000000e+00> : vector<1xf32>
      %78 = vector.multi_reduction <add>, %77, %cst_44 [1, 2] : vector<1x1x16xf32> to vector<1xf32>
      %79 = vector.shape_cast %78 : vector<1xf32> to vector<1x1x1xf32>
      %80 = vector.extract %79[0, 0, 0] : f32 from vector<1x1x1xf32>
      %81 = vector.shape_cast %71 : vector<1x16xf32> to vector<1x1x16xf32>
      %cst_45 = arith.constant dense<0.000000e+00> : vector<1xf32>
      %82 = vector.multi_reduction <add>, %81, %cst_45 [1, 2] : vector<1x1x16xf32> to vector<1xf32>
      %83 = vector.shape_cast %82 : vector<1xf32> to vector<1x1x1xf32>
      %84 = vector.extract %83[0, 0, 0] : f32 from vector<1x1x1xf32>
      %cst_46 = arith.constant 0.000000e+00 : f32
      %85 = arith.subf %cst_46, %84 : f32
      %86 = arith.mulf %51, %52 : vector<1x16xf32>
      %cst_47 = arith.constant 1.000000e+00 : f32
      %87 = vector.broadcast %cst_47 : f32 to vector<1x16xf32>
      %88 = arith.subf %87, %51 : vector<1x16xf32>
      %89 = arith.mulf %88, %53 : vector<1x16xf32>
      %90 = arith.addf %86, %89 : vector<1x16xf32>
      %91 = vector.shape_cast %90 : vector<1x16xf32> to vector<1x1x16xf32>
      %cst_48 = arith.constant dense<0.000000e+00> : vector<1xf32>
      %92 = vector.multi_reduction <add>, %91, %cst_48 [1, 2] : vector<1x1x16xf32> to vector<1xf32>
      %93 = vector.shape_cast %92 : vector<1xf32> to vector<1x1x1xf32>
      %94 = vector.extract %93[0, 0, 0] : f32 from vector<1x1x1xf32>
      %c0_49 = arith.constant 0 : index
      %c0_50 = arith.constant 0 : index
      %c0_51 = arith.constant 0 : index
      %95 = vector.load %arg11[%c0_49, %c0_50, %c0_51] : memref<1x128x1xf32, #tpu.memory_space<vmem>>, vector<1x128x1xf32>
      %96 = vector.shape_cast %95 : vector<1x128x1xf32> to vector<1x1x128x1xf32>
      %cst_52 = arith.constant dense<0.000000e+00> : vector<1xf32>
      %97 = vector.multi_reduction <add>, %96, %cst_52 [1, 2, 3] : vector<1x1x128x1xf32> to vector<1xf32>
      %98 = vector.shape_cast %97 : vector<1xf32> to vector<1x1x1x1xf32>
      %99 = vector.extract %98[0, 0, 0, 0] : f32 from vector<1x1x1x1xf32>
      %c0_53 = arith.constant 0 : index
      %c0_54 = arith.constant 0 : index
      %c0_55 = arith.constant 0 : index
      %100 = vector.load %arg12[%c0_53, %c0_54, %c0_55] : memref<1x128x1xf32, #tpu.memory_space<vmem>>, vector<1x128x1xf32>
      %101 = vector.shape_cast %100 : vector<1x128x1xf32> to vector<1x1x128x1xf32>
      %cst_56 = arith.constant dense<0.000000e+00> : vector<1xf32>
      %102 = vector.multi_reduction <add>, %101, %cst_56 [1, 2, 3] : vector<1x1x128x1xf32> to vector<1xf32>
      %103 = vector.shape_cast %102 : vector<1xf32> to vector<1x1x1x1xf32>
      %104 = vector.extract %103[0, 0, 0, 0] : f32 from vector<1x1x1x1xf32>
      %105 = arith.addf %94, %85 : f32
      %106 = tpu.iota {dimensions = array<i32: 1>} : vector<8x128xi32>
      %c0_i32_57 = arith.constant 0 : i32
      %107 = vector.broadcast %c0_i32_57 : i32 to vector<8x128xi32>
      %108 = arith.cmpi eq, %106, %107 : vector<8x128xi32>
      %c1_i32_58 = arith.constant 1 : i32
      %109 = vector.broadcast %c1_i32_58 : i32 to vector<8x128xi32>
      %110 = arith.cmpi eq, %106, %109 : vector<8x128xi32>
      %c2_i32 = arith.constant 2 : i32
      %111 = vector.broadcast %c2_i32 : i32 to vector<8x128xi32>
      %112 = arith.cmpi eq, %106, %111 : vector<8x128xi32>
      %c3_i32 = arith.constant 3 : i32
      %113 = vector.broadcast %c3_i32 : i32 to vector<8x128xi32>
      %114 = arith.cmpi eq, %106, %113 : vector<8x128xi32>
      %115 = vector.broadcast %105 : f32 to vector<8x128xf32>
      %116 = vector.broadcast %cst_26 : f32 to vector<8x128xf32>
      %117 = arith.select %114, %115, %116 : vector<8x128xi1>, vector<8x128xf32>
      %118 = vector.broadcast %80 : f32 to vector<8x128xf32>
      %119 = arith.select %112, %118, %117 : vector<8x128xi1>, vector<8x128xf32>
      %120 = vector.broadcast %104 : f32 to vector<8x128xf32>
      %121 = arith.select %110, %120, %119 : vector<8x128xi1>, vector<8x128xf32>
      %122 = vector.broadcast %99 : f32 to vector<8x128xf32>
      %123 = arith.select %108, %122, %121 : vector<8x128xi1>, vector<8x128xf32>
      %124 = vector.shape_cast %123 : vector<8x128xf32> to vector<1x1x8x128xf32>
      %c0_59 = arith.constant 0 : index
      %c0_60 = arith.constant 0 : index
      %c0_61 = arith.constant 0 : index
      %c0_62 = arith.constant 0 : index
      %125 = vector.load %arg10[%c0_59, %c0_60, %c0_61, %c0_62] : memref<1x1x8x128xf32, #tpu.memory_space<vmem>>, vector<1x1x8x128xf32>
      tpu.vector_store %arg10[%c0_59, %c0_60, %c0_61, %c0_62], %124 {strides = array<i32>} : memref<1x1x8x128xf32, #tpu.memory_space<vmem>>, vector<1x1x8x128xf32>,
    } else {
    }
    return
  }
  func.func @transform_0(%arg0: i32, %arg1: i32, %arg2: i32) -> (i32, i32, i32) {
    %c2_i32 = arith.constant 2 : i32
    %0 = arith.muli %arg1, %c2_i32 : i32
    %1 = arith.addi %0, %arg2 : i32
    %c0_i32 = arith.constant 0 : i32
    %c0_i32_0 = arith.constant 0 : i32
    return %arg0, %1, %c0_i32 : i32, i32, i32
  }
  func.func @transform_1(%arg0: i32, %arg1: i32, %arg2: i32) -> (i32, i32, i32) {
    %c2_i32 = arith.constant 2 : i32
    %0 = arith.muli %arg1, %c2_i32 : i32
    %1 = arith.addi %0, %arg2 : i32
    %c0_i32 = arith.constant 0 : i32
    %c0_i32_0 = arith.constant 0 : i32
    return %arg0, %1, %c0_i32 : i32, i32, i32
  }
  func.func @transform_2(%arg0: i32, %arg1: i32, %arg2: i32) -> (i32, i32, i32) {
    %c2_i32 = arith.constant 2 : i32
    %0 = arith.muli %arg1, %c2_i32 : i32
    %1 = arith.addi %0, %arg2 : i32
    %c0_i32 = arith.constant 0 : i32
    %c0_i32_0 = arith.constant 0 : i32
    return %arg0, %1, %c0_i32 : i32, i32, i32
  }
  func.func @transform_3(%arg0: i32, %arg1: i32, %arg2: i32) -> (i32, i32, i32) {
    %c0_i32 = arith.constant 0 : i32
    %c0_i32_0 = arith.constant 0 : i32
    %c0_i32_1 = arith.constant 0 : i32
    return %arg0, %c0_i32, %c0_i32_0 : i32, i32, i32
  }
  func.func @transform_4(%arg0: i32, %arg1: i32, %arg2: i32) -> (i32, i32, i32) {
    %c0_i32 = arith.constant 0 : i32
    %c0_i32_0 = arith.constant 0 : i32
    %c0_i32_1 = arith.constant 0 : i32
    return %arg0, %c0_i32, %c0_i32_0 : i32, i32, i32
  }
  func.func @transform_5(%arg0: i32, %arg1: i32, %arg2: i32) -> (i32, i32) {
    %c0_i32 = arith.constant 0 : i32
    %c0_i32_0 = arith.constant 0 : i32
    %c0_i32_1 = arith.constant 0 : i32
    return %c0_i32, %c0_i32_0 : i32, i32
  }
  func.func @transform_6(%arg0: i32, %arg1: i32, %arg2: i32) -> (i32, i32) {
    %c0_i32 = arith.constant 0 : i32
    %c0_i32_0 = arith.constant 0 : i32
    %c0_i32_1 = arith.constant 0 : i32
    return %c0_i32, %c0_i32_0 : i32, i32
  }
  func.func @transform_7(%arg0: i32, %arg1: i32, %arg2: i32) -> (i32, i32, i32, i32) {
    %c0_i32 = arith.constant 0 : i32
    %c0_i32_0 = arith.constant 0 : i32
    %c0_i32_1 = arith.constant 0 : i32
    return %arg0, %arg1, %c0_i32, %c0_i32_0 : i32, i32, i32, i32
  }
}

</mosaic_0001>

<llo_original>
// kernel: tpu_custom_call.1
$region0: #{tpu_custom_call.1}
  #allocation0 [shape = 'u32[]', space=smem, size = 0x4, offset = 0x4, fixed_abs, tag = 'smem constant byte address 0x4 - core index']
  #allocation1 [shape = 'u32[144,128]{1,0:T(1,128)}', space=vmem, size = 0x12000, scoped, tag = 'internal scratch']
  #allocation2 [shape = 'f32[1,128,1]{2,1,0:T(8,128)}', space=vmem, size = 0x10000, scoped, tag = 'scratch operand']
  #allocation3 [shape = 'f32[1,128,1]{2,1,0:T(8,128)}', space=vmem, size = 0x10000, scoped, tag = 'scratch operand']
  %s0 = inlined_call_operand.vmem [shape: s32[2,256,2], index: 0, kind: input, shape index: {}]
  %s1 = inlined_call_operand.vmem [shape: f32[2,256,2], index: 1, kind: input, shape index: {}]
  %s2 = inlined_call_operand.vmem [shape: bf16[2,256,128], index: 2, kind: input, shape index: {}]
  %s3 = inlined_call_operand.vmem [shape: f32[2,1,16], index: 3, kind: input, shape index: {}]
  %s4 = inlined_call_operand.vmem [shape: f32[2,1,16], index: 4, kind: input, shape index: {}]
  %s5 = inlined_call_operand.vmem [shape: f32[1,16], index: 5, kind: input, shape index: {}]
  %s6 = inlined_call_operand.vmem [shape: f32[1,16], index: 6, kind: input, shape index: {}]
  %s7 = inlined_call_operand.hbm [shape: f32[2,1,8,128], index: 7, kind: output, shape index: {}]
  %s8 = sld [smem:[#allocation0]]
  $region69: #{tpu_custom_call.1} parent=0
    _
  %s10 = ssub.s32 1, %s8
  %s11 = scalar_select 0, %s10, %s8
  $region1: #{tpu_custom_call.1} parent=0
    #allocation4 [shape = 'u8[8192]{0}', space=vmem, size = 0x2000, scoped, tag = 'output window, operand 0']
    #allocation5 [shape = 's32[2]{0}', space=sflag, size = 0x8, scoped, tag = 'scoped memory for tpu_custom_call.1']
    %12 = vsyncpa [#allocation5], 0
    %s13 = scalar_lea.sflag [#allocation5], 1
    %14 = vsyncpa %s13, 0
    loop: start=0, step=1, limit=6
    $region2: #{tpu_custom_call.1} parent=1 // loop_pre_header
      _
    $region3: #{tpu_custom_call.1} parent=1 // loop_header
      %s16 = sphi 0, %s20
      %p17 = scmp.ge.s32.totalorder %s16, 6
      %s23 = sphi 0, %s42
      %s24 = sphi 0, %s38
      %s25 = sphi 0, %s34
      %s26 = sphi 0, %s23
      %s27 = sphi 0, %s24
      %s28 = sphi 0, %s25
      %s29 = sphi 0, %s26
      %s30 = sphi 0, %s27
      %s31 = sphi 0, %s28
      %s51 = sphi 0, %s53
      %s54 = sphi 0, %s51
      %s55 = sphi 0, %s54
      %s71 = sphi 0, %s55
      %s83 = sphi 0, %s85
      %s86 = sphi 0, %s83
      %s87 = sphi 0, %s86
      %s103 = sphi 0, %s87
      %s115 = sphi 0, %s117
      %s118 = sphi 0, %s115
      %s119 = sphi 0, %s118
      %s135 = sphi 0, %s119
      %s141 = sphi 0, %s143
      %s144 = sphi 0, %s141
      %s145 = sphi 0, %s144
      %s161 = sphi 0, %s145
      %s167 = sphi 0, %s169
      %s170 = sphi 0, %s167
      %s171 = sphi 0, %s170
      %s187 = sphi 0, %s171
      %s191 = sphi 0, %s191
      %s193 = sphi 0, %s191
      %s194 = sphi 0, %s193
      %s208 = sphi 0, %s194
      %s212 = sphi 0, %s212
      %s214 = sphi 0, %s212
      %s215 = sphi 0, %s214
      %s229 = sphi 0, %s215
      %s237 = sphi 0, %s239
      %s240 = sphi 0, %s237
      %s241 = sphi 0, %s240
      %s257 = sphi 0, %s241
    $region4: #{tpu_custom_call.1} parent=1 // loop_header_branch
      %19 = sbr.rel (%p17) target = $region8
    $region5: #{tpu_custom_call.1} parent=1 // loop_body
      %s21 = ssub.s32 %s16, 1
      %s22 = ssub.s32 %s16, 2
      %s32 = sadd.s32 1, %s25
      %p33 = scmp.ge.s32.totalorder %s32, 2
      %s34 = scalar_select %p33, 0, %s32
      %s35 = sadd.s32 1, %s24
      %s36 = scalar_select %p33, %s35, %s24
      %p37 = scmp.ge.s32.totalorder %s36, 1
      %s38 = scalar_select %p37, 0, %s36
      %s39 = sadd.s32 1, %s23
      %s40 = scalar_select %p37, %s39, %s23
      %p41 = scmp.ge.s32.totalorder %s40, 2
      %s42 = scalar_select %p41, 0, %s40
      %s43 = smul.u32 %s24, 2
      %s44 = sadd.s32 %s43, %s25
      %s45 = smul.u32 %s38, 2
      %s46 = sadd.s32 %s45, %s34
      %s47 = ssub.s32 %s23, %s42
      %s48 = ssub.s32 %s44, %s46
      %s49 = sor.u32 %s47, %s48
      %p50 = scmp.eq.s32.totalorder %s49, 0
      %s52 = sadd.s32 %s51, 1
      %s53 = scalar_select %p50, %s51, %s52
      %p56 = pneg %p50
      %p57 = scmp.eq.s32.totalorder %s16, 3
      %p58 = por %p56, %p57
      %p59 = scmp.ne.s32.totalorder %s51, %s54
      %p60 = scmp.eq.s32.totalorder %s16, 0
      %p61 = por %p59, %p60
      %p62 = scmp.ne.s32.totalorder %s51, %s54
      %p63 = scmp.eq.s32.totalorder %s21, 3
      %p64 = por %p62, %p63
      %p65 = scmp.ne.s32.totalorder %s54, %s55
      %p66 = scmp.eq.s32.totalorder %s21, 0
      %p67 = por %p65, %p66
      %p68 = scmp.ne.s32.totalorder %s54, %s55
      %p69 = scmp.eq.s32.totalorder %s22, 3
      %p70 = por %p68, %p69
      %p72 = scmp.ne.s32.totalorder %s55, %s71
      %p73 = scmp.eq.s32.totalorder %s22, 0
      %p74 = por %p72, %p73
      %s75 = smul.u32 %s24, 2
      %s76 = sadd.s32 %s75, %s25
      %s77 = smul.u32 %s38, 2
      %s78 = sadd.s32 %s77, %s34
      %s79 = ssub.s32 %s23, %s42
      %s80 = ssub.s32 %s76, %s78
      %s81 = sor.u32 %s79, %s80
      %p82 = scmp.eq.s32.totalorder %s81, 0
      %s84 = sadd.s32 %s83, 1
      %s85 = scalar_select %p82, %s83, %s84
      %p88 = pneg %p82
      %p89 = scmp.eq.s32.totalorder %s16, 3
      %p90 = por %p88, %p89
      %p91 = scmp.ne.s32.totalorder %s83, %s86
      %p92 = scmp.eq.s32.totalorder %s16, 0
      %p93 = por %p91, %p92
      %p94 = scmp.ne.s32.totalorder %s83, %s86
      %p95 = scmp.eq.s32.totalorder %s21, 3
      %p96 = por %p94, %p95
      %p97 = scmp.ne.s32.totalorder %s86, %s87
      %p98 = scmp.eq.s32.totalorder %s21, 0
      %p99 = por %p97, %p98
      %p100 = scmp.ne.s32.totalorder %s86, %s87
      %p101 = scmp.eq.s32.totalorder %s22, 3
      %p102 = por %p100, %p101
      %p104 = scmp.ne.s32.totalorder %s87, %s103
      %p105 = scmp.eq.s32.totalorder %s22, 0
      %p106 = por %p104, %p105
      %s107 = smul.u32 %s24, 2
      %s108 = sadd.s32 %s107, %s25
      %s109 = smul.u32 %s38, 2
      %s110 = sadd.s32 %s109, %s34
      %s111 = ssub.s32 %s23, %s42
      %s112 = ssub.s32 %s108, %s110
      %s113 = sor.u32 %s111, %s112
      %p114 = scmp.eq.s32.totalorder %s113, 0
      %s116 = sadd.s32 %s115, 1
      %s117 = scalar_select %p114, %s115, %s116
      %p120 = pneg %p114
      %p121 = scmp.eq.s32.totalorder %s16, 3
      %p122 = por %p120, %p121
      %p123 = scmp.ne.s32.totalorder %s115, %s118
      %p124 = scmp.eq.s32.totalorder %s16, 0
      %p125 = por %p123, %p124
      %p126 = scmp.ne.s32.totalorder %s115, %s118
      %p127 = scmp.eq.s32.totalorder %s21, 3
      %p128 = por %p126, %p127
      %p129 = scmp.ne.s32.totalorder %s118, %s119
      %p130 = scmp.eq.s32.totalorder %s21, 0
      %p131 = por %p129, %p130
      %p132 = scmp.ne.s32.totalorder %s118, %s119
      %p133 = scmp.eq.s32.totalorder %s22, 3
      %p134 = por %p132, %p133
      %p136 = scmp.ne.s32.totalorder %s119, %s135
      %p137 = scmp.eq.s32.totalorder %s22, 0
      %p138 = por %p136, %p137
      %s139 = ssub.s32 %s23, %s42
      %p140 = scmp.eq.s32.totalorder %s139, 0
      %s142 = sadd.s32 %s141, 1
      %s143 = scalar_select %p140, %s141, %s142
      %p146 = pneg %p140
      %p147 = scmp.eq.s32.totalorder %s16, 3
      %p148 = por %p146, %p147
      %p149 = scmp.ne.s32.totalorder %s141, %s144
      %p150 = scmp.eq.s32.totalorder %s16, 0
      %p151 = por %p149, %p150
      %p152 = scmp.ne.s32.totalorder %s141, %s144
      %p153 = scmp.eq.s32.totalorder %s21, 3
      %p154 = por %p152, %p153
      %p155 = scmp.ne.s32.totalorder %s144, %s145
      %p156 = scmp.eq.s32.totalorder %s21, 0
      %p157 = por %p155, %p156
      %p158 = scmp.ne.s32.totalorder %s144, %s145
      %p159 = scmp.eq.s32.totalorder %s22, 3
      %p160 = por %p158, %p159
      %p162 = scmp.ne.s32.totalorder %s145, %s161
      %p163 = scmp.eq.s32.totalorder %s22, 0
      %p164 = por %p162, %p163
      %s165 = ssub.s32 %s23, %s42
      %p166 = scmp.eq.s32.totalorder %s165, 0
      %s168 = sadd.s32 %s167, 1
      %s169 = scalar_select %p166, %s167, %s168
      %p172 = pneg %p166
      %p173 = scmp.eq.s32.totalorder %s16, 3
      %p174 = por %p172, %p173
      %p175 = scmp.ne.s32.totalorder %s167, %s170
      %p176 = scmp.eq.s32.totalorder %s16, 0
      %p177 = por %p175, %p176
      %p178 = scmp.ne.s32.totalorder %s167, %s170
      %p179 = scmp.eq.s32.totalorder %s21, 3
      %p180 = por %p178, %p179
      %p181 = scmp.ne.s32.totalorder %s170, %s171
      %p182 = scmp.eq.s32.totalorder %s21, 0
      %p183 = por %p181, %p182
      %p184 = scmp.ne.s32.totalorder %s170, %s171
      %p185 = scmp.eq.s32.totalorder %s22, 3
      %p186 = por %p184, %p185
      %p188 = scmp.ne.s32.totalorder %s171, %s187
      %p189 = scmp.eq.s32.totalorder %s22, 0
      %p190 = por %p188, %p189
      %s192 = sadd.s32 %s191, 1
      %p195 = scmp.eq.s32.totalorder %s16, 3
      %p196 = scmp.ne.s32.totalorder %s191, %s193
      %p197 = scmp.eq.s32.totalorder %s16, 0
      %p198 = por %p196, %p197
      %p199 = scmp.ne.s32.totalorder %s191, %s193
      %p200 = scmp.eq.s32.totalorder %s21, 3
      %p201 = por %p199, %p200
      %p202 = scmp.ne.s32.totalorder %s193, %s194
      %p203 = scmp.eq.s32.totalorder %s21, 0
      %p204 = por %p202, %p203
      %p205 = scmp.ne.s32.totalorder %s193, %s194
      %p206 = scmp.eq.s32.totalorder %s22, 3
      %p207 = por %p205, %p206
      %p209 = scmp.ne.s32.totalorder %s194, %s208
      %p210 = scmp.eq.s32.totalorder %s22, 0
      %p211 = por %p209, %p210
      %s213 = sadd.s32 %s212, 1
      %p216 = scmp.eq.s32.totalorder %s16, 3
      %p217 = scmp.ne.s32.totalorder %s212, %s214
      %p218 = scmp.eq.s32.totalorder %s16, 0
      %p219 = por %p217, %p218
      %p220 = scmp.ne.s32.totalorder %s212, %s214
      %p221 = scmp.eq.s32.totalorder %s21, 3
      %p222 = por %p220, %p221
      %p223 = scmp.ne.s32.totalorder %s214, %s215
      %p224 = scmp.eq.s32.totalorder %s21, 0
      %p225 = por %p223, %p224
      %p226 = scmp.ne.s32.totalorder %s214, %s215
      %p227 = scmp.eq.s32.totalorder %s22, 3
      %p228 = por %p226, %p227
      %p230 = scmp.ne.s32.totalorder %s215, %s229
      %p231 = scmp.eq.s32.totalorder %s22, 0
      %p232 = por %p230, %p231
      %s233 = ssub.s32 %s23, %s42
      %s234 = ssub.s32 %s24, %s38
      %s235 = sor.u32 %s233, %s234
      %p236 = scmp.eq.s32.totalorder %s235, 0
      %s238 = sadd.s32 %s237, 1
      %s239 = scalar_select %p236, %s237, %s238
      %p242 = pneg %p236
      %p243 = scmp.eq.s32.totalorder %s16, 3
      %p244 = por %p242, %p243
      %p245 = scmp.ne.s32.totalorder %s237, %s240
      %p246 = scmp.eq.s32.totalorder %s16, 0
      %p247 = por %p245, %p246
      %p248 = scmp.ne.s32.totalorder %s237, %s240
      %p249 = scmp.eq.s32.totalorder %s21, 3
      %p250 = por %p248, %p249
      %p251 = scmp.ne.s32.totalorder %s240, %s241
      %p252 = scmp.eq.s32.totalorder %s21, 0
      %p253 = por %p251, %p252
      %p254 = scmp.ne.s32.totalorder %s240, %s241
      %p255 = scmp.eq.s32.totalorder %s22, 3
      %p256 = por %p254, %p255
      %p258 = scmp.ne.s32.totalorder %s241, %s257
      %p259 = scmp.eq.s32.totalorder %s22, 0
      %p260 = por %p258, %p259
      %p261 = scmp.le.s32.totalorder 1, %s16
      %p262 = scmp.lt.s32.totalorder %s16, 5
      %p263 = pnand %p261, %p262
      %p264 = pneg %p263
      // Predicated region
      $region9: #{tpu_custom_call.1} parent=5 // pred_check
        _
      $region10: #{tpu_custom_call.1} parent=5 // pred_check_branch
        %266 = sbr.rel (%p263) target = $region12
      $region11: #{tpu_custom_call.1} parent=5 // pred_region
        %s267 = ssub.s32 %s16, 1
        // Predicated region
        $region13: #{tpu_custom_call.1} parent=11 // pred_check
          %p268 = pneg %p204
        $region14: #{tpu_custom_call.1} parent=11 // pred_check_branch
          %270 = sbr.rel (%p268) target = $region16
        $region15: #{tpu_custom_call.1} parent=11 // pred_region
          _
        $region16: #{tpu_custom_call.1} parent=11 // pred_fallthru
          _
        // Predicated region
        $region17: #{tpu_custom_call.1} parent=11 // pred_check
          %p271 = pneg %p225
        $region18: #{tpu_custom_call.1} parent=11 // pred_check_branch
          %273 = sbr.rel (%p271) target = $region20
        $region19: #{tpu_custom_call.1} parent=11 // pred_region
          _
        $region20: #{tpu_custom_call.1} parent=11 // pred_fallthru
          _
      $region12: #{tpu_custom_call.1} parent=5 // pred_fallthru
        _
      %p274 = scmp.lt.s32.totalorder %s16, 4
      // Predicated region
      $region21: #{tpu_custom_call.1} parent=5 // pred_check
        %p275 = pneg %p274
      $region22: #{tpu_custom_call.1} parent=5 // pred_check_branch
        %277 = sbr.rel (%p275) target = $region24
      $region23: #{tpu_custom_call.1} parent=5 // pred_region
        // Predicated region
        $region25: #{tpu_custom_call.1} parent=23 // pred_check
          %p278 = pneg %p61
        $region26: #{tpu_custom_call.1} parent=23 // pred_check_branch
          %280 = sbr.rel (%p278) target = $region28
        $region27: #{tpu_custom_call.1} parent=23 // pred_region
          %s281 = smul.u32 %s24, 2
          %s282 = sadd.s32 %s281, %s25
          %s283 = smul.u32 16, %s282
          %p284 = scmp.lt.s32.totalorder %s23, 1
          %s285 = scalar_select %p284, %s23, 1
          %p286 = scmp.lt.s32.totalorder %s283, 31
          %s287 = scalar_select %p286, %s283, 31
          %s288 = smul.addr %s285, 32
          %s289 = sadd.s32 %s287, %s288
          %s290 = smul.addr %s289, 8
          %s291 = scalar_lea.vmem %s0, %s290
          %s292 = smul.u32 %s24, 2
          %s293 = sadd.s32 %s292, %s25
          %s294 = smul.u32 16, %s293
        $region28: #{tpu_custom_call.1} parent=23 // pred_fallthru
          _
        // Predicated region
        $region29: #{tpu_custom_call.1} parent=23 // pred_check
          %p295 = pneg %p93
        $region30: #{tpu_custom_call.1} parent=23 // pred_check_branch
          %297 = sbr.rel (%p295) target = $region32
        $region31: #{tpu_custom_call.1} parent=23 // pred_region
          %s298 = smul.u32 %s24, 2
          %s299 = sadd.s32 %s298, %s25
          %s300 = smul.u32 16, %s299
          %p301 = scmp.lt.s32.totalorder %s23, 1
          %s302 = scalar_select %p301, %s23, 1
          %p303 = scmp.lt.s32.totalorder %s300, 31
          %s304 = scalar_select %p303, %s300, 31
          %s305 = smul.addr %s302, 32
          %s306 = sadd.s32 %s304, %s305
          %s307 = smul.addr %s306, 8
          %s308 = scalar_lea.vmem %s1, %s307
          %s309 = smul.u32 %s24, 2
          %s310 = sadd.s32 %s309, %s25
          %s311 = smul.u32 16, %s310
        $region32: #{tpu_custom_call.1} parent=23 // pred_fallthru
          _
        // Predicated region
        $region33: #{tpu_custom_call.1} parent=23 // pred_check
          %p312 = pneg %p125
        $region34: #{tpu_custom_call.1} parent=23 // pred_check_branch
          %314 = sbr.rel (%p312) target = $region36
        $region35: #{tpu_custom_call.1} parent=23 // pred_region
          %s315 = smul.u32 %s24, 2
          %s316 = sadd.s32 %s315, %s25
          %s317 = smul.u32 16, %s316
          %p318 = scmp.lt.s32.totalorder %s23, 1
          %s319 = scalar_select %p318, %s23, 1
          %p320 = scmp.lt.s32.totalorder %s317, 31
          %s321 = scalar_select %p320, %s317, 31
          %s322 = smul.addr %s319, 32
          %s323 = sadd.s32 %s321, %s322
          %s324 = smul.addr %s323, 4
          %s325 = scalar_lea.vmem %s2, %s324
          %s326 = smul.u32 %s24, 2
          %s327 = sadd.s32 %s326, %s25
          %s328 = smul.u32 16, %s327
        $region36: #{tpu_custom_call.1} parent=23 // pred_fallthru
          _
        // Predicated region
        $region37: #{tpu_custom_call.1} parent=23 // pred_check
          %p329 = pneg %p151
        $region38: #{tpu_custom_call.1} parent=23 // pred_check_branch
          %331 = sbr.rel (%p329) target = $region40
        $region39: #{tpu_custom_call.1} parent=23 // pred_region
          %p332 = scmp.lt.s32.totalorder %s23, 1
          %s333 = scalar_select %p332, %s23, 1
          %s334 = scalar_lea.vmem %s3, %s333
        $region40: #{tpu_custom_call.1} parent=23 // pred_fallthru
          _
        // Predicated region
        $region41: #{tpu_custom_call.1} parent=23 // pred_check
          %p335 = pneg %p177
        $region42: #{tpu_custom_call.1} parent=23 // pred_check_branch
          %337 = sbr.rel (%p335) target = $region44
        $region43: #{tpu_custom_call.1} parent=23 // pred_region
          %p338 = scmp.lt.s32.totalorder %s23, 1
          %s339 = scalar_select %p338, %s23, 1
          %s340 = scalar_lea.vmem %s4, %s339
        $region44: #{tpu_custom_call.1} parent=23 // pred_fallthru
          _
      $region24: #{tpu_custom_call.1} parent=5 // pred_fallthru
        _
      %p341 = scmp.le.s32.totalorder 1, %s16
      %p342 = scmp.lt.s32.totalorder %s16, 5
      %p343 = pnand %p341, %p342
      %p344 = pneg %p343
      // Predicated region
      $region45: #{tpu_custom_call.1} parent=5 // pred_check
        _
      $region46: #{tpu_custom_call.1} parent=5 // pred_check_branch
        %346 = sbr.rel (%p343) target = $region48
      $region47: #{tpu_custom_call.1} parent=5 // pred_region
        %s347 = ssub.s32 %s16, 1
        %s348 = smul.u32 %s27, 2
        %s349 = sadd.s32 %s348, %s28
        %s350 = smul.u32 16, %s349
        %p351 = scmp.lt.s32.totalorder %s26, 1
        %s352 = scalar_select %p351, %s26, 1
        %p353 = scmp.lt.s32.totalorder %s350, 31
        %s354 = scalar_select %p353, %s350, 31
        %s355 = smul.addr %s352, 32
        %s356 = sadd.s32 %s354, %s355
        %s357 = smul.addr %s356, 8
        %s358 = scalar_lea.vmem %s0, %s357
        %p359 = pneg %p67
        %p360 = pneg %p64
        %s361 = smul.u32 %s27, 2
        %s362 = sadd.s32 %s361, %s28
        %s363 = smul.u32 16, %s362
        %p364 = scmp.lt.s32.totalorder %s26, 1
        %s365 = scalar_select %p364, %s26, 1
        %p366 = scmp.lt.s32.totalorder %s363, 31
        %s367 = scalar_select %p366, %s363, 31
        %s368 = smul.addr %s365, 32
        %s369 = sadd.s32 %s367, %s368
        %s370 = smul.addr %s369, 8
        %s371 = scalar_lea.vmem %s1, %s370
        %p372 = pneg %p99
        %p373 = pneg %p96
        %s374 = smul.u32 %s27, 2
        %s375 = sadd.s32 %s374, %s28
        %s376 = smul.u32 16, %s375
        %p377 = scmp.lt.s32.totalorder %s26, 1
        %s378 = scalar_select %p377, %s26, 1
        %p379 = scmp.lt.s32.totalorder %s376, 31
        %s380 = scalar_select %p379, %s376, 31
        %s381 = smul.addr %s378, 32
        %s382 = sadd.s32 %s380, %s381
        %s383 = smul.addr %s382, 4
        %s384 = scalar_lea.vmem %s2, %s383
        %p385 = pneg %p131
        %p386 = pneg %p128
        %p387 = scmp.lt.s32.totalorder %s26, 1
        %s388 = scalar_select %p387, %s26, 1
        %s389 = scalar_lea.vmem %s3, %s388
        %p390 = pneg %p157
        %p391 = pneg %p154
        %p392 = scmp.lt.s32.totalorder %s26, 1
        %s393 = scalar_select %p392, %s26, 1
        %s394 = scalar_lea.vmem %s4, %s393
        %p395 = pneg %p183
        %p396 = pneg %p180
        %p397 = pneg %p204
        %p398 = pneg %p201
        %p399 = pneg %p225
        %p400 = pneg %p222
        %p401 = pneg %p253
        %p402 = pneg %p250
        %s403 = sand.u32 %s240, 1
        %s404 = scalar_lea.sflag [#allocation5], %s403
        %s405 = sand.u32 %s240, 1
        %s406 = smul.addr %s405, 8
        %s407 = scalar_lea.vmem [#allocation4], %s406
        %s408 = smul.u32 %s27, 2
        %s409 = sadd.s32 %s408, %s28
        %s410 = smul.u32 16, %s409
        %p411 = scmp.lt.s32.totalorder %s26, 1
        %s412 = scalar_select %p411, %s26, 1
        %p413 = scmp.lt.s32.totalorder %s410, 31
        %s414 = scalar_select %p413, %s410, 31
        %s415 = smul.addr %s412, 32
        %s416 = sadd.s32 %s414, %s415
        %s417 = smul.addr %s416, 8
        %s418 = scalar_lea.vmem %s0, %s417
        %s419 = smul.u32 %s27, 2
        %s420 = sadd.s32 %s419, %s28
        %s421 = smul.u32 16, %s420
        %s422 = smul.u32 %s27, 2
        %s423 = sadd.s32 %s422, %s28
        %s424 = smul.u32 16, %s423
        %p425 = scmp.lt.s32.totalorder %s26, 1
        %s426 = scalar_select %p425, %s26, 1
        %p427 = scmp.lt.s32.totalorder %s424, 31
        %s428 = scalar_select %p427, %s424, 31
        %s429 = smul.addr %s426, 32
        %s430 = sadd.s32 %s428, %s429
        %s431 = smul.addr %s430, 8
        %s432 = scalar_lea.vmem %s1, %s431
        %s433 = smul.u32 %s27, 2
        %s434 = sadd.s32 %s433, %s28
        %s435 = smul.u32 16, %s434
        %s436 = smul.u32 %s27, 2
        %s437 = sadd.s32 %s436, %s28
        %s438 = smul.u32 16, %s437
        %p439 = scmp.lt.s32.totalorder %s26, 1
        %s440 = scalar_select %p439, %s26, 1
        %p441 = scmp.lt.s32.totalorder %s438, 31
        %s442 = scalar_select %p441, %s438, 31
        %s443 = smul.addr %s440, 32
        %s444 = sadd.s32 %s442, %s443
        %s445 = smul.addr %s444, 4
        %s446 = scalar_lea.vmem %s2, %s445
        %s447 = smul.u32 %s27, 2
        %s448 = sadd.s32 %s447, %s28
        %s449 = smul.u32 16, %s448
        %p450 = scmp.lt.s32.totalorder %s26, 1
        %s451 = scalar_select %p450, %s26, 1
        %s452 = scalar_lea.vmem %s3, %s451
        %p453 = scmp.lt.s32.totalorder %s26, 1
        %s454 = scalar_select %p453, %s26, 1
        %s455 = scalar_lea.vmem %s4, %s454
        %p456 = scmp.eq.s32.totalorder %s28, 0
        // Predicated region
        $region49: #{tpu_custom_call.1} parent=47 // pred_check
          %p457 = pneg %p456
        $region50: #{tpu_custom_call.1} parent=47 // pred_check_branch
          %459 = sbr.rel (%p457) target = $region52
        $region51: #{tpu_custom_call.1} parent=47 // pred_region
          %vm460 = vcmask 7168
          %461 = vst.msk [vmem:[#allocation2] sm:$0xff] %vm460, 0.0
          %462 = vst.msk [vmem:[#allocation2 + $0x8] sm:$0xff] %vm460, 0.0
          %463 = vst.msk [vmem:[#allocation2 + $0x10] sm:$0xff] %vm460, 0.0
          %464 = vst.msk [vmem:[#allocation2 + $0x18] sm:$0xff] %vm460, 0.0
          %465 = vst.msk [vmem:[#allocation2 + $0x20] sm:$0xff] %vm460, 0.0
          %466 = vst.msk [vmem:[#allocation2 + $0x28] sm:$0xff] %vm460, 0.0
          %467 = vst.msk [vmem:[#allocation2 + $0x30] sm:$0xff] %vm460, 0.0
          %468 = vst.msk [vmem:[#allocation2 + $0x38] sm:$0xff] %vm460, 0.0
          %469 = vst.msk [vmem:[#allocation2 + $0x40] sm:$0xff] %vm460, 0.0
          %470 = vst.msk [vmem:[#allocation2 + $0x48] sm:$0xff] %vm460, 0.0
          %471 = vst.msk [vmem:[#allocation2 + $0x50] sm:$0xff] %vm460, 0.0
          %472 = vst.msk [vmem:[#allocation2 + $0x58] sm:$0xff] %vm460, 0.0
          %473 = vst.msk [vmem:[#allocation2 + $0x60] sm:$0xff] %vm460, 0.0
          %474 = vst.msk [vmem:[#allocation2 + $0x68] sm:$0xff] %vm460, 0.0
          %475 = vst.msk [vmem:[#allocation2 + $0x70] sm:$0xff] %vm460, 0.0
          %476 = vst.msk [vmem:[#allocation2 + $0x78] sm:$0xff] %vm460, 0.0
          %477 = vst.msk [vmem:[#allocation3] sm:$0xff] %vm460, 0.0
          %478 = vst.msk [vmem:[#allocation3 + $0x8] sm:$0xff] %vm460, 0.0
          %479 = vst.msk [vmem:[#allocation3 + $0x10] sm:$0xff] %vm460, 0.0
          %480 = vst.msk [vmem:[#allocation3 + $0x18] sm:$0xff] %vm460, 0.0
          %481 = vst.msk [vmem:[#allocation3 + $0x20] sm:$0xff] %vm460, 0.0
          %482 = vst.msk [vmem:[#allocation3 + $0x28] sm:$0xff] %vm460, 0.0
          %483 = vst.msk [vmem:[#allocation3 + $0x30] sm:$0xff] %vm460, 0.0
          %484 = vst.msk [vmem:[#allocation3 + $0x38] sm:$0xff] %vm460, 0.0
          %485 = vst.msk [vmem:[#allocation3 + $0x40] sm:$0xff] %vm460, 0.0
          %486 = vst.msk [vmem:[#allocation3 + $0x48] sm:$0xff] %vm460, 0.0
          %487 = vst.msk [vmem:[#allocation3 + $0x50] sm:$0xff] %vm460, 0.0
          %488 = vst.msk [vmem:[#allocation3 + $0x58] sm:$0xff] %vm460, 0.0
          %489 = vst.msk [vmem:[#allocation3 + $0x60] sm:$0xff] %vm460, 0.0
          %490 = vst.msk [vmem:[#allocation3 + $0x68] sm:$0xff] %vm460, 0.0
          %491 = vst.msk [vmem:[#allocation3 + $0x70] sm:$0xff] %vm460, 0.0
          %492 = vst.msk [vmem:[#allocation3 + $0x78] sm:$0xff] %vm460, 0.0
        $region52: #{tpu_custom_call.1} parent=47 // pred_fallthru
          _
        %v493 = vld [vmem:[%s446] sm:$0xf]
        %v494 = vld [vmem:[%s446 + $0x4] sm:$0xf]
        %v495 = vld [vmem:[%s446 + $0x8] sm:$0xf]
        %v496 = vld [vmem:[%s446 + $0xc] sm:$0xf]
        %v497 = vld [vmem:[%s446 + $0x10] sm:$0xf]
        %v498 = vld [vmem:[%s446 + $0x14] sm:$0xf]
        %v499 = vld [vmem:[%s446 + $0x18] sm:$0xf]
        %v500 = vld [vmem:[%s446 + $0x1c] sm:$0xf]
        %v501 = vld [vmem:[%s446 + $0x20] sm:$0xf]
        %v502 = vld [vmem:[%s446 + $0x24] sm:$0xf]
        %v503 = vld [vmem:[%s446 + $0x28] sm:$0xf]
        %v504 = vld [vmem:[%s446 + $0x2c] sm:$0xf]
        %v505 = vld [vmem:[%s446 + $0x30] sm:$0xf]
        %v506 = vld [vmem:[%s446 + $0x34] sm:$0xf]
        %v507 = vld [vmem:[%s446 + $0x38] sm:$0xf]
        %v508 = vld [vmem:[%s446 + $0x3c] sm:$0xf]
        %v509 = vunpack.c.l.bf16 %v493
        %v510 = vunpack.c.l.bf16 %v494
        %v511 = vunpack.c.l.bf16 %v495
        %v512 = vunpack.c.l.bf16 %v496
        %v513 = vunpack.c.l.bf16 %v497
        %v514 = vunpack.c.l.bf16 %v498
        %v515 = vunpack.c.l.bf16 %v499
        %v516 = vunpack.c.l.bf16 %v500
        %v517 = vunpack.c.l.bf16 %v501
        %v518 = vunpack.c.l.bf16 %v502
        %v519 = vunpack.c.l.bf16 %v503
        %v520 = vunpack.c.l.bf16 %v504
        %v521 = vunpack.c.l.bf16 %v505
        %v522 = vunpack.c.l.bf16 %v506
        %v523 = vunpack.c.l.bf16 %v507
        %v524 = vunpack.c.l.bf16 %v508
        %v525 = vld [vmem:[%s418] sm:$0xff]
        %v526 = vld [vmem:[%s418 + $0x8] sm:$0xff]
        %v527 = vld [vmem:[%s418 + $0x10] sm:$0xff]
        %v528 = vld [vmem:[%s418 + $0x18] sm:$0xff]
        %v529 = vld [vmem:[%s418 + $0x20] sm:$0xff]
        %v530 = vld [vmem:[%s418 + $0x28] sm:$0xff]
        %v531 = vld [vmem:[%s418 + $0x30] sm:$0xff]
        %v532 = vld [vmem:[%s418 + $0x38] sm:$0xff]
        %v533 = vld [vmem:[%s418 + $0x40] sm:$0xff]
        %v534 = vld [vmem:[%s418 + $0x48] sm:$0xff]
        %v535 = vld [vmem:[%s418 + $0x50] sm:$0xff]
        %v536 = vld [vmem:[%s418 + $0x58] sm:$0xff]
        %v537 = vld [vmem:[%s418 + $0x60] sm:$0xff]
        %v538 = vld [vmem:[%s418 + $0x68] sm:$0xff]
        %v539 = vld [vmem:[%s418 + $0x70] sm:$0xff]
        %v540 = vld [vmem:[%s418 + $0x78] sm:$0xff]
        %v541 = vld [vmem:[%s432] sm:$0xff]
        %v542 = vld [vmem:[%s432 + $0x8] sm:$0xff]
        %v543 = vld [vmem:[%s432 + $0x10] sm:$0xff]
        %v544 = vld [vmem:[%s432 + $0x18] sm:$0xff]
        %v545 = vld [vmem:[%s432 + $0x20] sm:$0xff]
        %v546 = vld [vmem:[%s432 + $0x28] sm:$0xff]
        %v547 = vld [vmem:[%s432 + $0x30] sm:$0xff]
        %v548 = vld [vmem:[%s432 + $0x38] sm:$0xff]
        %v549 = vld [vmem:[%s432 + $0x40] sm:$0xff]
        %v550 = vld [vmem:[%s432 + $0x48] sm:$0xff]
        %v551 = vld [vmem:[%s432 + $0x50] sm:$0xff]
        %v552 = vld [vmem:[%s432 + $0x58] sm:$0xff]
        %v553 = vld [vmem:[%s432 + $0x60] sm:$0xff]
        %v554 = vld [vmem:[%s432 + $0x68] sm:$0xff]
        %v555 = vld [vmem:[%s432 + $0x70] sm:$0xff]
        %v556 = vld [vmem:[%s432 + $0x78] sm:$0xff]
        %557 = vmax.xlane.f32.xlu0 %v509
        %v558 = vpop.xlane.xlu0 %557
        %559 = vmax.xlane.f32.xlu0 %v510
        %v560 = vpop.xlane.xlu0 %559
        %561 = vmax.xlane.f32.xlu0 %v511
        %v562 = vpop.xlane.xlu0 %561
        %563 = vmax.xlane.f32.xlu0 %v512
        %v564 = vpop.xlane.xlu0 %563
        %565 = vmax.xlane.f32.xlu0 %v513
        %v566 = vpop.xlane.xlu0 %565
        %567 = vmax.xlane.f32.xlu0 %v514
        %v568 = vpop.xlane.xlu0 %567
        %569 = vmax.xlane.f32.xlu0 %v515
        %v570 = vpop.xlane.xlu0 %569
        %571 = vmax.xlane.f32.xlu0 %v516
        %v572 = vpop.xlane.xlu0 %571
        %573 = vmax.xlane.f32.xlu0 %v517
        %v574 = vpop.xlane.xlu0 %573
        %575 = vmax.xlane.f32.xlu0 %v518
        %v576 = vpop.xlane.xlu0 %575
        %577 = vmax.xlane.f32.xlu0 %v519
        %v578 = vpop.xlane.xlu0 %577
        %579 = vmax.xlane.f32.xlu0 %v520
        %v580 = vpop.xlane.xlu0 %579
        %581 = vmax.xlane.f32.xlu0 %v521
        %v582 = vpop.xlane.xlu0 %581
        %583 = vmax.xlane.f32.xlu0 %v522
        %v584 = vpop.xlane.xlu0 %583
        %585 = vmax.xlane.f32.xlu0 %v523
        %v586 = vpop.xlane.xlu0 %585
        %587 = vmax.xlane.f32.xlu0 %v524
        %v588 = vpop.xlane.xlu0 %587
        %v589 = vsub.f32 %v509, %v558
        %v590 = vsub.f32 %v510, %v560
        %v591 = vsub.f32 %v511, %v562
        %v592 = vsub.f32 %v512, %v564
        %v593 = vsub.f32 %v513, %v566
        %v594 = vsub.f32 %v514, %v568
        %v595 = vsub.f32 %v515, %v570
        %v596 = vsub.f32 %v516, %v572
        %v597 = vsub.f32 %v517, %v574
        %v598 = vsub.f32 %v518, %v576
        %v599 = vsub.f32 %v519, %v578
        %v600 = vsub.f32 %v520, %v580
        %v601 = vsub.f32 %v521, %v582
        %v602 = vsub.f32 %v522, %v584
        %v603 = vsub.f32 %v523, %v586
        %v604 = vsub.f32 %v524, %v588
        %v605 = vmul.f32 %v589, 1.442695
        %v606 = vpow.pop %v605
        %v607 = vmul.f32 %v590, 1.442695
        %v608 = vpow.pop %v607
        %v609 = vmul.f32 %v591, 1.442695
        %v610 = vpow.pop %v609
        %v611 = vmul.f32 %v592, 1.442695
        %v612 = vpow.pop %v611
        %v613 = vmul.f32 %v593, 1.442695
        %v614 = vpow.pop %v613
        %v615 = vmul.f32 %v594, 1.442695
        %v616 = vpow.pop %v615
        %v617 = vmul.f32 %v595, 1.442695
        %v618 = vpow.pop %v617
        %v619 = vmul.f32 %v596, 1.442695
        %v620 = vpow.pop %v619
        %v621 = vmul.f32 %v597, 1.442695
        %v622 = vpow.pop %v621
        %v623 = vmul.f32 %v598, 1.442695
        %v624 = vpow.pop %v623
        %v625 = vmul.f32 %v599, 1.442695
        %v626 = vpow.pop %v625
        %v627 = vmul.f32 %v600, 1.442695
        %v628 = vpow.pop %v627
        %v629 = vmul.f32 %v601, 1.442695
        %v630 = vpow.pop %v629
        %v631 = vmul.f32 %v602, 1.442695
        %v632 = vpow.pop %v631
        %v633 = vmul.f32 %v603, 1.442695
        %v634 = vpow.pop %v633
        %v635 = vmul.f32 %v604, 1.442695
        %v636 = vpow.pop %v635
        %637 = vadd.xlane.f32.xlu0 %v606
        %v638 = vpop.xlane.xlu0 %637
        %639 = vadd.xlane.f32.xlu0 %v608
        %v640 = vpop.xlane.xlu0 %639
        %641 = vadd.xlane.f32.xlu0 %v610
        %v642 = vpop.xlane.xlu0 %641
        %643 = vadd.xlane.f32.xlu0 %v612
        %v644 = vpop.xlane.xlu0 %643
        %645 = vadd.xlane.f32.xlu0 %v614
        %v646 = vpop.xlane.xlu0 %645
        %647 = vadd.xlane.f32.xlu0 %v616
        %v648 = vpop.xlane.xlu0 %647
        %649 = vadd.xlane.f32.xlu0 %v618
        %v650 = vpop.xlane.xlu0 %649
        %651 = vadd.xlane.f32.xlu0 %v620
        %v652 = vpop.xlane.xlu0 %651
        %653 = vadd.xlane.f32.xlu0 %v622
        %v654 = vpop.xlane.xlu0 %653
        %655 = vadd.xlane.f32.xlu0 %v624
        %v656 = vpop.xlane.xlu0 %655
        %657 = vadd.xlane.f32.xlu0 %v626
        %v658 = vpop.xlane.xlu0 %657
        %659 = vadd.xlane.f32.xlu0 %v628
        %v660 = vpop.xlane.xlu0 %659
        %661 = vadd.xlane.f32.xlu0 %v630
        %v662 = vpop.xlane.xlu0 %661
        %663 = vadd.xlane.f32.xlu0 %v632
        %v664 = vpop.xlane.xlu0 %663
        %665 = vadd.xlane.f32.xlu0 %v634
        %v666 = vpop.xlane.xlu0 %665
        %667 = vadd.xlane.f32.xlu0 %v636
        %v668 = vpop.xlane.xlu0 %667
        %v669 = vlog2.pop %v638
        %v670 = vmul.f32 %v669, 0.6931472
        %v671 = vlog2.pop %v640
        %v672 = vmul.f32 %v671, 0.6931472
        %v673 = vlog2.pop %v642
        %v674 = vmul.f32 %v673, 0.6931472
        %v675 = vlog2.pop %v644
        %v676 = vmul.f32 %v675, 0.6931472
        %v677 = vlog2.pop %v646
        %v678 = vmul.f32 %v677, 0.6931472
        %v679 = vlog2.pop %v648
        %v680 = vmul.f32 %v679, 0.6931472
        %v681 = vlog2.pop %v650
        %v682 = vmul.f32 %v681, 0.6931472
        %v683 = vlog2.pop %v652
        %v684 = vmul.f32 %v683, 0.6931472
        %v685 = vlog2.pop %v654
        %v686 = vmul.f32 %v685, 0.6931472
        %v687 = vlog2.pop %v656
        %v688 = vmul.f32 %v687, 0.6931472
        %v689 = vlog2.pop %v658
        %v690 = vmul.f32 %v689, 0.6931472
        %v691 = vlog2.pop %v660
        %v692 = vmul.f32 %v691, 0.6931472
        %v693 = vlog2.pop %v662
        %v694 = vmul.f32 %v693, 0.6931472
        %v695 = vlog2.pop %v664
        %v696 = vmul.f32 %v695, 0.6931472
        %v697 = vlog2.pop %v666
        %v698 = vmul.f32 %v697, 0.6931472
        %v699 = vlog2.pop %v668
        %v700 = vmul.f32 %v699, 0.6931472
        %v701 = vadd.f32 %v558, %v670
        %v702 = vadd.f32 %v560, %v672
        %v703 = vadd.f32 %v562, %v674
        %v704 = vadd.f32 %v564, %v676
        %v705 = vadd.f32 %v566, %v678
        %v706 = vadd.f32 %v568, %v680
        %v707 = vadd.f32 %v570, %v682
        %v708 = vadd.f32 %v572, %v684
        %v709 = vadd.f32 %v574, %v686
        %v710 = vadd.f32 %v576, %v688
        %v711 = vadd.f32 %v578, %v690
        %v712 = vadd.f32 %v580, %v692
        %v713 = vadd.f32 %v582, %v694
        %v714 = vadd.f32 %v584, %v696
        %v715 = vadd.f32 %v586, %v698
        %v716 = vadd.f32 %v588, %v700
        %v717 = vlaneseq
        %v718 = vand.u32 %v717, 127
        %719 = vset.pattern.permute.xlu0 0
        %720 = vperm.xlu0 %719, %v525
        %v721 = vpop.permute.xlu0 %720
        %722 = vset.pattern.permute.xlu0 0
        %723 = vperm.xlu0 %722, %v526
        %v724 = vpop.permute.xlu0 %723
        %725 = vset.pattern.permute.xlu0 0
        %726 = vperm.xlu0 %725, %v527
        %v727 = vpop.permute.xlu0 %726
        %728 = vset.pattern.permute.xlu0 0
        %729 = vperm.xlu0 %728, %v528
        %v730 = vpop.permute.xlu0 %729
        %731 = vset.pattern.permute.xlu0 0
        %732 = vperm.xlu0 %731, %v529
        %v733 = vpop.permute.xlu0 %732
        %734 = vset.pattern.permute.xlu0 0
        %735 = vperm.xlu0 %734, %v530
        %v736 = vpop.permute.xlu0 %735
        %737 = vset.pattern.permute.xlu0 0
        %738 = vperm.xlu0 %737, %v531
        %v739 = vpop.permute.xlu0 %738
        %740 = vset.pattern.permute.xlu0 0
        %741 = vperm.xlu0 %740, %v532
        %v742 = vpop.permute.xlu0 %741
        %743 = vset.pattern.permute.xlu0 0
        %744 = vperm.xlu0 %743, %v533
        %v745 = vpop.permute.xlu0 %744
        %746 = vset.pattern.permute.xlu0 0
        %747 = vperm.xlu0 %746, %v534
        %v748 = vpop.permute.xlu0 %747
        %749 = vset.pattern.permute.xlu0 0
        %750 = vperm.xlu0 %749, %v535
        %v751 = vpop.permute.xlu0 %750
        %752 = vset.pattern.permute.xlu0 0
        %753 = vperm.xlu0 %752, %v536
        %v754 = vpop.permute.xlu0 %753
        %755 = vset.pattern.permute.xlu0 0
        %756 = vperm.xlu0 %755, %v537
        %v757 = vpop.permute.xlu0 %756
        %758 = vset.pattern.permute.xlu0 0
        %759 = vperm.xlu0 %758, %v538
        %v760 = vpop.permute.xlu0 %759
        %761 = vset.pattern.permute.xlu0 0
        %762 = vperm.xlu0 %761, %v539
        %v763 = vpop.permute.xlu0 %762
        %764 = vset.pattern.permute.xlu0 0
        %765 = vperm.xlu0 %764, %v540
        %v766 = vpop.permute.xlu0 %765
        %vm767 = vcmp.eq.s32.totalorder %v718, %v721
        %vm768 = vcmp.eq.s32.totalorder %v718, %v724
        %vm769 = vcmp.eq.s32.totalorder %v718, %v727
        %vm770 = vcmp.eq.s32.totalorder %v718, %v730
        %vm771 = vcmp.eq.s32.totalorder %v718, %v733
        %vm772 = vcmp.eq.s32.totalorder %v718, %v736
        %vm773 = vcmp.eq.s32.totalorder %v718, %v739
        %vm774 = vcmp.eq.s32.totalorder %v718, %v742
        %vm775 = vcmp.eq.s32.totalorder %v718, %v745
        %vm776 = vcmp.eq.s32.totalorder %v718, %v748
        %vm777 = vcmp.eq.s32.totalorder %v718, %v751
        %vm778 = vcmp.eq.s32.totalorder %v718, %v754
        %vm779 = vcmp.eq.s32.totalorder %v718, %v757
        %vm780 = vcmp.eq.s32.totalorder %v718, %v760
        %vm781 = vcmp.eq.s32.totalorder %v718, %v763
        %vm782 = vcmp.eq.s32.totalorder %v718, %v766
        %v783 = vsel %vm767, %v509, 0.0
        %v784 = vsel %vm768, %v510, 0.0
        %v785 = vsel %vm769, %v511, 0.0
        %v786 = vsel %vm770, %v512, 0.0
        %v787 = vsel %vm771, %v513, 0.0
        %v788 = vsel %vm772, %v514, 0.0
        %v789 = vsel %vm773, %v515, 0.0
        %v790 = vsel %vm774, %v516, 0.0
        %v791 = vsel %vm775, %v517, 0.0
        %v792 = vsel %vm776, %v518, 0.0
        %v793 = vsel %vm777, %v519, 0.0
        %v794 = vsel %vm778, %v520, 0.0
        %v795 = vsel %vm779, %v521, 0.0
        %v796 = vsel %vm780, %v522, 0.0
        %v797 = vsel %vm781, %v523, 0.0
        %v798 = vsel %vm782, %v524, 0.0
        %799 = vadd.xlane.f32.xlu0 %v783
        %v800 = vpop.xlane.xlu0 %799
        %801 = vadd.xlane.f32.xlu0 %v784
        %v802 = vpop.xlane.xlu0 %801
        %803 = vadd.xlane.f32.xlu0 %v785
        %v804 = vpop.xlane.xlu0 %803
        %805 = vadd.xlane.f32.xlu0 %v786
        %v806 = vpop.xlane.xlu0 %805
        %807 = vadd.xlane.f32.xlu0 %v787
        %v808 = vpop.xlane.xlu0 %807
        %809 = vadd.xlane.f32.xlu0 %v788
        %v810 = vpop.xlane.xlu0 %809
        %811 = vadd.xlane.f32.xlu0 %v789
        %v812 = vpop.xlane.xlu0 %811
        %813 = vadd.xlane.f32.xlu0 %v790
        %v814 = vpop.xlane.xlu0 %813
        %815 = vadd.xlane.f32.xlu0 %v791
        %v816 = vpop.xlane.xlu0 %815
        %817 = vadd.xlane.f32.xlu0 %v792
        %v818 = vpop.xlane.xlu0 %817
        %819 = vadd.xlane.f32.xlu0 %v793
        %v820 = vpop.xlane.xlu0 %819
        %821 = vadd.xlane.f32.xlu0 %v794
        %v822 = vpop.xlane.xlu0 %821
        %823 = vadd.xlane.f32.xlu0 %v795
        %v824 = vpop.xlane.xlu0 %823
        %825 = vadd.xlane.f32.xlu0 %v796
        %v826 = vpop.xlane.xlu0 %825
        %827 = vadd.xlane.f32.xlu0 %v797
        %v828 = vpop.xlane.xlu0 %827
        %829 = vadd.xlane.f32.xlu0 %v798
        %v830 = vpop.xlane.xlu0 %829
        %831 = vset.pattern.permute.xlu0 1
        %832 = vperm.xlu0 %831, %v525
        %v833 = vpop.permute.xlu0 %832
        %834 = vset.pattern.permute.xlu0 1
        %835 = vperm.xlu0 %834, %v526
        %v836 = vpop.permute.xlu0 %835
        %837 = vset.pattern.permute.xlu0 1
        %838 = vperm.xlu0 %837, %v527
        %v839 = vpop.permute.xlu0 %838
        %840 = vset.pattern.permute.xlu0 1
        %841 = vperm.xlu0 %840, %v528
        %v842 = vpop.permute.xlu0 %841
        %843 = vset.pattern.permute.xlu0 1
        %844 = vperm.xlu0 %843, %v529
        %v845 = vpop.permute.xlu0 %844
        %846 = vset.pattern.permute.xlu0 1
        %847 = vperm.xlu0 %846, %v530
        %v848 = vpop.permute.xlu0 %847
        %849 = vset.pattern.permute.xlu0 1
        %850 = vperm.xlu0 %849, %v531
        %v851 = vpop.permute.xlu0 %850
        %852 = vset.pattern.permute.xlu0 1
        %853 = vperm.xlu0 %852, %v532
        %v854 = vpop.permute.xlu0 %853
        %855 = vset.pattern.permute.xlu0 1
        %856 = vperm.xlu0 %855, %v533
        %v857 = vpop.permute.xlu0 %856
        %858 = vset.pattern.permute.xlu0 1
        %859 = vperm.xlu0 %858, %v534
        %v860 = vpop.permute.xlu0 %859
        %861 = vset.pattern.permute.xlu0 1
        %862 = vperm.xlu0 %861, %v535
        %v863 = vpop.permute.xlu0 %862
        %864 = vset.pattern.permute.xlu0 1
        %865 = vperm.xlu0 %864, %v536
        %v866 = vpop.permute.xlu0 %865
        %867 = vset.pattern.permute.xlu0 1
        %868 = vperm.xlu0 %867, %v537
        %v869 = vpop.permute.xlu0 %868
        %870 = vset.pattern.permute.xlu0 1
        %871 = vperm.xlu0 %870, %v538
        %v872 = vpop.permute.xlu0 %871
        %873 = vset.pattern.permute.xlu0 1
        %874 = vperm.xlu0 %873, %v539
        %v875 = vpop.permute.xlu0 %874
        %876 = vset.pattern.permute.xlu0 1
        %877 = vperm.xlu0 %876, %v540
        %v878 = vpop.permute.xlu0 %877
        %vm879 = vcmp.eq.s32.totalorder %v718, %v833
        %vm880 = vcmp.eq.s32.totalorder %v718, %v836
        %vm881 = vcmp.eq.s32.totalorder %v718, %v839
        %vm882 = vcmp.eq.s32.totalorder %v718, %v842
        %vm883 = vcmp.eq.s32.totalorder %v718, %v845
        %vm884 = vcmp.eq.s32.totalorder %v718, %v848
        %vm885 = vcmp.eq.s32.totalorder %v718, %v851
        %vm886 = vcmp.eq.s32.totalorder %v718, %v854
        %vm887 = vcmp.eq.s32.totalorder %v718, %v857
        %vm888 = vcmp.eq.s32.totalorder %v718, %v860
        %vm889 = vcmp.eq.s32.totalorder %v718, %v863
        %vm890 = vcmp.eq.s32.totalorder %v718, %v866
        %vm891 = vcmp.eq.s32.totalorder %v718, %v869
        %vm892 = vcmp.eq.s32.totalorder %v718, %v872
        %vm893 = vcmp.eq.s32.totalorder %v718, %v875
        %vm894 = vcmp.eq.s32.totalorder %v718, %v878
        %v895 = vsel %vm879, %v509, 0.0
        %v896 = vsel %vm880, %v510, 0.0
        %v897 = vsel %vm881, %v511, 0.0
        %v898 = vsel %vm882, %v512, 0.0
        %v899 = vsel %vm883, %v513, 0.0
        %v900 = vsel %vm884, %v514, 0.0
        %v901 = vsel %vm885, %v515, 0.0
        %v902 = vsel %vm886, %v516, 0.0
        %v903 = vsel %vm887, %v517, 0.0
        %v904 = vsel %vm888, %v518, 0.0
        %v905 = vsel %vm889, %v519, 0.0
        %v906 = vsel %vm890, %v520, 0.0
        %v907 = vsel %vm891, %v521, 0.0
        %v908 = vsel %vm892, %v522, 0.0
        %v909 = vsel %vm893, %v523, 0.0
        %v910 = vsel %vm894, %v524, 0.0
        %911 = vadd.xlane.f32.xlu0 %v895
        %v912 = vpop.xlane.xlu0 %911
        %913 = vadd.xlane.f32.xlu0 %v896
        %v914 = vpop.xlane.xlu0 %913
        %915 = vadd.xlane.f32.xlu0 %v897
        %v916 = vpop.xlane.xlu0 %915
        %917 = vadd.xlane.f32.xlu0 %v898
        %v918 = vpop.xlane.xlu0 %917
        %919 = vadd.xlane.f32.xlu0 %v899
        %v920 = vpop.xlane.xlu0 %919
        %921 = vadd.xlane.f32.xlu0 %v900
        %v922 = vpop.xlane.xlu0 %921
        %923 = vadd.xlane.f32.xlu0 %v901
        %v924 = vpop.xlane.xlu0 %923
        %925 = vadd.xlane.f32.xlu0 %v902
        %v926 = vpop.xlane.xlu0 %925
        %927 = vadd.xlane.f32.xlu0 %v903
        %v928 = vpop.xlane.xlu0 %927
        %929 = vadd.xlane.f32.xlu0 %v904
        %v930 = vpop.xlane.xlu0 %929
        %931 = vadd.xlane.f32.xlu0 %v905
        %v932 = vpop.xlane.xlu0 %931
        %933 = vadd.xlane.f32.xlu0 %v906
        %v934 = vpop.xlane.xlu0 %933
        %935 = vadd.xlane.f32.xlu0 %v907
        %v936 = vpop.xlane.xlu0 %935
        %937 = vadd.xlane.f32.xlu0 %v908
        %v938 = vpop.xlane.xlu0 %937
        %939 = vadd.xlane.f32.xlu0 %v909
        %v940 = vpop.xlane.xlu0 %939
        %941 = vadd.xlane.f32.xlu0 %v910
        %v942 = vpop.xlane.xlu0 %941
        %v943 = vsub.f32 %v701, %v800
        %v944 = vsub.f32 %v702, %v802
        %v945 = vsub.f32 %v703, %v804
        %v946 = vsub.f32 %v704, %v806
        %v947 = vsub.f32 %v705, %v808
        %v948 = vsub.f32 %v706, %v810
        %v949 = vsub.f32 %v707, %v812
        %v950 = vsub.f32 %v708, %v814
        %v951 = vsub.f32 %v709, %v816
        %v952 = vsub.f32 %v710, %v818
        %v953 = vsub.f32 %v711, %v820
        %v954 = vsub.f32 %v712, %v822
        %v955 = vsub.f32 %v713, %v824
        %v956 = vsub.f32 %v714, %v826
        %v957 = vsub.f32 %v715, %v828
        %v958 = vsub.f32 %v716, %v830
        %v959 = vmul.f32 %v541, %v943
        %v960 = vmul.f32 %v542, %v944
        %v961 = vmul.f32 %v543, %v945
        %v962 = vmul.f32 %v544, %v946
        %v963 = vmul.f32 %v545, %v947
        %v964 = vmul.f32 %v546, %v948
        %v965 = vmul.f32 %v547, %v949
        %v966 = vmul.f32 %v548, %v950
        %v967 = vmul.f32 %v549, %v951
        %v968 = vmul.f32 %v550, %v952
        %v969 = vmul.f32 %v551, %v953
        %v970 = vmul.f32 %v552, %v954
        %v971 = vmul.f32 %v553, %v955
        %v972 = vmul.f32 %v554, %v956
        %v973 = vmul.f32 %v555, %v957
        %v974 = vmul.f32 %v556, %v958
        %v975 = vsub.f32 %v912, %v701
        %v976 = vsub.f32 %v914, %v702
        %v977 = vsub.f32 %v916, %v703
        %v978 = vsub.f32 %v918, %v704
        %v979 = vsub.f32 %v920, %v705
        %v980 = vsub.f32 %v922, %v706
        %v981 = vsub.f32 %v924, %v707
        %v982 = vsub.f32 %v926, %v708
        %v983 = vsub.f32 %v928, %v709
        %v984 = vsub.f32 %v930, %v710
        %v985 = vsub.f32 %v932, %v711
        %v986 = vsub.f32 %v934, %v712
        %v987 = vsub.f32 %v936, %v713
        %v988 = vsub.f32 %v938, %v714
        %v989 = vsub.f32 %v940, %v715
        %v990 = vsub.f32 %v942, %v716
        %v991 = vadd.f32 %v541, %v975
        %v992 = vadd.f32 %v542, %v976
        %v993 = vadd.f32 %v543, %v977
        %v994 = vadd.f32 %v544, %v978
        %v995 = vadd.f32 %v545, %v979
        %v996 = vadd.f32 %v546, %v980
        %v997 = vadd.f32 %v547, %v981
        %v998 = vadd.f32 %v548, %v982
        %v999 = vadd.f32 %v549, %v983
        %v1000 = vadd.f32 %v550, %v984
        %v1001 = vadd.f32 %v551, %v985
        %v1002 = vadd.f32 %v552, %v986
        %v1003 = vadd.f32 %v553, %v987
        %v1004 = vadd.f32 %v554, %v988
        %v1005 = vadd.f32 %v555, %v989
        %v1006 = vadd.f32 %v556, %v990
        %v1007 = vld [vmem:[#allocation2] sm:$0xff]
        %v1008 = vld [vmem:[#allocation2 + $0x8] sm:$0xff]
        %v1009 = vld [vmem:[#allocation2 + $0x10] sm:$0xff]
        %v1010 = vld [vmem:[#allocation2 + $0x18] sm:$0xff]
        %v1011 = vld [vmem:[#allocation2 + $0x20] sm:$0xff]
        %v1012 = vld [vmem:[#allocation2 + $0x28] sm:$0xff]
        %v1013 = vld [vmem:[#allocation2 + $0x30] sm:$0xff]
        %v1014 = vld [vmem:[#allocation2 + $0x38] sm:$0xff]
        %v1015 = vld [vmem:[#allocation2 + $0x40] sm:$0xff]
        %v1016 = vld [vmem:[#allocation2 + $0x48] sm:$0xff]
        %v1017 = vld [vmem:[#allocation2 + $0x50] sm:$0xff]
        %v1018 = vld [vmem:[#allocation2 + $0x58] sm:$0xff]
        %v1019 = vld [vmem:[#allocation2 + $0x60] sm:$0xff]
        %v1020 = vld [vmem:[#allocation2 + $0x68] sm:$0xff]
        %v1021 = vld [vmem:[#allocation2 + $0x70] sm:$0xff]
        %v1022 = vld [vmem:[#allocation2 + $0x78] sm:$0xff]
        %v1023 = vadd.f32 %v1007, %v959
        %v1024 = vadd.f32 %v1008, %v960
        %v1025 = vadd.f32 %v1009, %v961
        %v1026 = vadd.f32 %v1010, %v962
        %v1027 = vadd.f32 %v1011, %v963
        %v1028 = vadd.f32 %v1012, %v964
        %v1029 = vadd.f32 %v1013, %v965
        %v1030 = vadd.f32 %v1014, %v966
        %v1031 = vadd.f32 %v1015, %v967
        %v1032 = vadd.f32 %v1016, %v968
        %v1033 = vadd.f32 %v1017, %v969
        %v1034 = vadd.f32 %v1018, %v970
        %v1035 = vadd.f32 %v1019, %v971
        %v1036 = vadd.f32 %v1020, %v972
        %v1037 = vadd.f32 %v1021, %v973
        %v1038 = vadd.f32 %v1022, %v974
        %vm1039 = vcmask 7168
        %1040 = vst.msk [vmem:[#allocation2] sm:$0xff] %vm1039, %v1023
        %1041 = vst.msk [vmem:[#allocation2 + $0x8] sm:$0xff] %vm1039, %v1024
        %1042 = vst.msk [vmem:[#allocation2 + $0x10] sm:$0xff] %vm1039, %v1025
        %1043 = vst.msk [vmem:[#allocation2 + $0x18] sm:$0xff] %vm1039, %v1026
        %1044 = vst.msk [vmem:[#allocation2 + $0x20] sm:$0xff] %vm1039, %v1027
        %1045 = vst.msk [vmem:[#allocation2 + $0x28] sm:$0xff] %vm1039, %v1028
        %1046 = vst.msk [vmem:[#allocation2 + $0x30] sm:$0xff] %vm1039, %v1029
        %1047 = vst.msk [vmem:[#allocation2 + $0x38] sm:$0xff] %vm1039, %v1030
        %1048 = vst.msk [vmem:[#allocation2 + $0x40] sm:$0xff] %vm1039, %v1031
        %1049 = vst.msk [vmem:[#allocation2 + $0x48] sm:$0xff] %vm1039, %v1032
        %1050 = vst.msk [vmem:[#allocation2 + $0x50] sm:$0xff] %vm1039, %v1033
        %1051 = vst.msk [vmem:[#allocation2 + $0x58] sm:$0xff] %vm1039, %v1034
        %1052 = vst.msk [vmem:[#allocation2 + $0x60] sm:$0xff] %vm1039, %v1035
        %1053 = vst.msk [vmem:[#allocation2 + $0x68] sm:$0xff] %vm1039, %v1036
        %1054 = vst.msk [vmem:[#allocation2 + $0x70] sm:$0xff] %vm1039, %v1037
        %1055 = vst.msk [vmem:[#allocation2 + $0x78] sm:$0xff] %vm1039, %v1038
        %v1056 = vld [vmem:[#allocation3] sm:$0xff]
        %v1057 = vld [vmem:[#allocation3 + $0x8] sm:$0xff]
        %v1058 = vld [vmem:[#allocation3 + $0x10] sm:$0xff]
        %v1059 = vld [vmem:[#allocation3 + $0x18] sm:$0xff]
        %v1060 = vld [vmem:[#allocation3 + $0x20] sm:$0xff]
        %v1061 = vld [vmem:[#allocation3 + $0x28] sm:$0xff]
        %v1062 = vld [vmem:[#allocation3 + $0x30] sm:$0xff]
        %v1063 = vld [vmem:[#allocation3 + $0x38] sm:$0xff]
        %v1064 = vld [vmem:[#allocation3 + $0x40] sm:$0xff]
        %v1065 = vld [vmem:[#allocation3 + $0x48] sm:$0xff]
        %v1066 = vld [vmem:[#allocation3 + $0x50] sm:$0xff]
        %v1067 = vld [vmem:[#allocation3 + $0x58] sm:$0xff]
        %v1068 = vld [vmem:[#allocation3 + $0x60] sm:$0xff]
        %v1069 = vld [vmem:[#allocation3 + $0x68] sm:$0xff]
        %v1070 = vld [vmem:[#allocation3 + $0x70] sm:$0xff]
        %v1071 = vld [vmem:[#allocation3 + $0x78] sm:$0xff]
        %1088 = vrot.lane.b32.xlu0 %v991, 127
        %v1089 = vpop.permute.xlu0 %1088
        %1090 = vrot.lane.b32.xlu0 %v992, 127
        %v1091 = vpop.permute.xlu0 %1090
        %1092 = vrot.lane.b32.xlu0 %v993, 127
        %v1093 = vpop.permute.xlu0 %1092
        %1094 = vrot.lane.b32.xlu0 %v994, 127
        %v1095 = vpop.permute.xlu0 %1094
        %1096 = vrot.lane.b32.xlu0 %v995, 127
        %v1097 = vpop.permute.xlu0 %1096
        %1098 = vrot.lane.b32.xlu0 %v996, 127
        %v1099 = vpop.permute.xlu0 %1098
        %1100 = vrot.lane.b32.xlu0 %v997, 127
        %v1101 = vpop.permute.xlu0 %1100
        %1102 = vrot.lane.b32.xlu0 %v998, 127
        %v1103 = vpop.permute.xlu0 %1102
        %1104 = vrot.lane.b32.xlu0 %v999, 127
        %v1105 = vpop.permute.xlu0 %1104
        %1106 = vrot.lane.b32.xlu0 %v1000, 127
        %v1107 = vpop.permute.xlu0 %1106
        %1108 = vrot.lane.b32.xlu0 %v1001, 127
        %v1109 = vpop.permute.xlu0 %1108
        %1110 = vrot.lane.b32.xlu0 %v1002, 127
        %v1111 = vpop.permute.xlu0 %1110
        %1112 = vrot.lane.b32.xlu0 %v1003, 127
        %v1113 = vpop.permute.xlu0 %1112
        %1114 = vrot.lane.b32.xlu0 %v1004, 127
        %v1115 = vpop.permute.xlu0 %1114
        %1116 = vrot.lane.b32.xlu0 %v1005, 127
        %v1117 = vpop.permute.xlu0 %1116
        %1118 = vrot.lane.b32.xlu0 %v1006, 127
        %v1119 = vpop.permute.xlu0 %1118
        %v1136 = vadd.f32 %v1056, %v1089
        %v1137 = vadd.f32 %v1057, %v1091
        %v1138 = vadd.f32 %v1058, %v1093
        %v1139 = vadd.f32 %v1059, %v1095
        %v1140 = vadd.f32 %v1060, %v1097
        %v1141 = vadd.f32 %v1061, %v1099
        %v1142 = vadd.f32 %v1062, %v1101
        %v1143 = vadd.f32 %v1063, %v1103
        %v1144 = vadd.f32 %v1064, %v1105
        %v1145 = vadd.f32 %v1065, %v1107
        %v1146 = vadd.f32 %v1066, %v1109
        %v1147 = vadd.f32 %v1067, %v1111
        %v1148 = vadd.f32 %v1068, %v1113
        %v1149 = vadd.f32 %v1069, %v1115
        %v1150 = vadd.f32 %v1070, %v1117
        %v1151 = vadd.f32 %v1071, %v1119
        %1152 = vst.msk [vmem:[#allocation3] sm:$0xff] %vm1039, %v1136
        %1153 = vst.msk [vmem:[#allocation3 + $0x8] sm:$0xff] %vm1039, %v1137
        %1154 = vst.msk [vmem:[#allocation3 + $0x10] sm:$0xff] %vm1039, %v1138
        %1155 = vst.msk [vmem:[#allocation3 + $0x18] sm:$0xff] %vm1039, %v1139
        %1156 = vst.msk [vmem:[#allocation3 + $0x20] sm:$0xff] %vm1039, %v1140
        %1157 = vst.msk [vmem:[#allocation3 + $0x28] sm:$0xff] %vm1039, %v1141
        %1158 = vst.msk [vmem:[#allocation3 + $0x30] sm:$0xff] %vm1039, %v1142
        %1159 = vst.msk [vmem:[#allocation3 + $0x38] sm:$0xff] %vm1039, %v1143
        %1160 = vst.msk [vmem:[#allocation3 + $0x40] sm:$0xff] %vm1039, %v1144
        %1161 = vst.msk [vmem:[#allocation3 + $0x48] sm:$0xff] %vm1039, %v1145
        %1162 = vst.msk [vmem:[#allocation3 + $0x50] sm:$0xff] %vm1039, %v1146
        %1163 = vst.msk [vmem:[#allocation3 + $0x58] sm:$0xff] %vm1039, %v1147
        %1164 = vst.msk [vmem:[#allocation3 + $0x60] sm:$0xff] %vm1039, %v1148
        %1165 = vst.msk [vmem:[#allocation3 + $0x68] sm:$0xff] %vm1039, %v1149
        %1166 = vst.msk [vmem:[#allocation3 + $0x70] sm:$0xff] %vm1039, %v1150
        %1167 = vst.msk [vmem:[#allocation3 + $0x78] sm:$0xff] %vm1039, %v1151
        %p1168 = scmp.eq.s32.totalorder %s28, 1
        // Predicated region
        $region53: #{tpu_custom_call.1} parent=47 // pred_check
          %p1169 = pneg %p1168
        $region54: #{tpu_custom_call.1} parent=47 // pred_check_branch
          %1171 = sbr.rel (%p1169) target = $region56
        $region55: #{tpu_custom_call.1} parent=47 // pred_region
          %v1172 = vld [vmem:[%s452] sm:$0x1]
          %v1173 = vld [vmem:[%s455] sm:$0x1]
          %v1174 = vld [vmem:[%s5] sm:$0x1]
          %v1175 = vld [vmem:[%s6] sm:$0x1]
          %v1176 = vand.u32 2147483647, %v1172
          %v1177 = vsub.f32 0.0, %v1176
          %v1178 = vmul.f32 %v1177, 1.442695
          %v1179 = vpow.pop %v1178
          %v1180 = vadd.f32 %v1179, 1.0
          %vm1181 = vcmp.eq.f32.partialorder %v1180, 1.0
          %v1182 = vsub.f32 %v1180, 1.0
          %v1183 = vsel %vm1181, 1.0, %v1182
          %v1184 = vlog2.pop %v1180
          %v1185 = vmul.f32 %v1184, 0.6931472
          %v1186 = vrcp.pop %v1183
          %v1187 = vmul.f32 %v1179, %v1186
          %v1188 = vmul.f32 %v1185, %v1187
          %v1189 = vsel %vm1181, %v1179, %v1188
          %v1190 = vmax.f32 %v1172, 0.0
          %v1191 = vmul.f32 %v1172, %v1173
          %v1192 = vsub.f32 %v1190, %v1191
          %v1193 = vadd.f32 %v1192, %v1189
          %vm1194 = vcmask 122880
          %v1195 = vsel %vm1194, %v1193, 0.0
          %1196 = vadd.xlane.f32.xlu0 %v1195
          %v1197 = vpop.xlane.xlu0 %1196
          %v1198 = vrot.slane %v1197, 4
          %v1199 = vadd.f32 %v1197, %v1198
          %v1200 = vrot.slane %v1199, 2
          %v1201 = vadd.f32 %v1199, %v1200
          %v1202 = vrot.slane %v1201, 1
          %v1203 = vadd.f32 %v1201, %v1202
          %s1204 = vtos %v1203
          %v1205 = vsel %vm1194, %v1189, 0.0
          %1206 = vadd.xlane.f32.xlu0 %v1205
          %v1207 = vpop.xlane.xlu0 %1206
          %v1208 = vrot.slane %v1207, 4
          %v1209 = vadd.f32 %v1207, %v1208
          %v1210 = vrot.slane %v1209, 2
          %v1211 = vadd.f32 %v1209, %v1210
          %v1212 = vrot.slane %v1211, 1
          %v1213 = vadd.f32 %v1211, %v1212
          %s1214 = vtos %v1213
          %s1215 = ssub.f32 0.0, %s1214
          %v1216 = vmul.f32 %v1173, %v1174
          %v1217 = vsub.f32 1.0, %v1173
          %v1218 = vmul.f32 %v1217, %v1175
          %v1219 = vadd.f32 %v1216, %v1218
          %v1220 = vsel %vm1194, %v1219, 0.0
          %1221 = vadd.xlane.f32.xlu0 %v1220
          %v1222 = vpop.xlane.xlu0 %1221
          %v1223 = vrot.slane %v1222, 4
          %v1224 = vadd.f32 %v1222, %v1223
          %v1225 = vrot.slane %v1224, 2
          %v1226 = vadd.f32 %v1224, %v1225
          %v1227 = vrot.slane %v1226, 1
          %v1228 = vadd.f32 %v1226, %v1227
          %s1229 = vtos %v1228
          %v1230 = vld [vmem:[#allocation2] sm:$0xff]
          %v1231 = vld [vmem:[#allocation2 + $0x8] sm:$0xff]
          %v1232 = vld [vmem:[#allocation2 + $0x10] sm:$0xff]
          %v1233 = vld [vmem:[#allocation2 + $0x18] sm:$0xff]
          %v1234 = vld [vmem:[#allocation2 + $0x20] sm:$0xff]
          %v1235 = vld [vmem:[#allocation2 + $0x28] sm:$0xff]
          %v1236 = vld [vmem:[#allocation2 + $0x30] sm:$0xff]
          %v1237 = vld [vmem:[#allocation2 + $0x38] sm:$0xff]
          %v1238 = vld [vmem:[#allocation2 + $0x40] sm:$0xff]
          %v1239 = vld [vmem:[#allocation2 + $0x48] sm:$0xff]
          %v1240 = vld [vmem:[#allocation2 + $0x50] sm:$0xff]
          %v1241 = vld [vmem:[#allocation2 + $0x58] sm:$0xff]
          %v1242 = vld [vmem:[#allocation2 + $0x60] sm:$0xff]
          %v1243 = vld [vmem:[#allocation2 + $0x68] sm:$0xff]
          %v1244 = vld [vmem:[#allocation2 + $0x70] sm:$0xff]
          %v1245 = vld [vmem:[#allocation2 + $0x78] sm:$0xff]
          %v1246 = vsel %vm1039, %v1230, 0.0
          %v1247 = vsel %vm1039, %v1231, 0.0
          %v1248 = vadd.f32 %v1246, %v1247
          %v1249 = vsel %vm1039, %v1232, 0.0
          %v1250 = vadd.f32 %v1248, %v1249
          %v1251 = vsel %vm1039, %v1233, 0.0
          %v1252 = vadd.f32 %v1250, %v1251
          %v1253 = vsel %vm1039, %v1234, 0.0
          %v1254 = vadd.f32 %v1252, %v1253
          %v1255 = vsel %vm1039, %v1235, 0.0
          %v1256 = vadd.f32 %v1254, %v1255
          %v1257 = vsel %vm1039, %v1236, 0.0
          %v1258 = vadd.f32 %v1256, %v1257
          %v1259 = vsel %vm1039, %v1237, 0.0
          %v1260 = vadd.f32 %v1258, %v1259
          %v1261 = vsel %vm1039, %v1238, 0.0
          %v1262 = vadd.f32 %v1260, %v1261
          %v1263 = vsel %vm1039, %v1239, 0.0
          %v1264 = vadd.f32 %v1262, %v1263
          %v1265 = vsel %vm1039, %v1240, 0.0
          %v1266 = vadd.f32 %v1264, %v1265
          %v1267 = vsel %vm1039, %v1241, 0.0
          %v1268 = vadd.f32 %v1266, %v1267
          %v1269 = vsel %vm1039, %v1242, 0.0
          %v1270 = vadd.f32 %v1268, %v1269
          %v1271 = vsel %vm1039, %v1243, 0.0
          %v1272 = vadd.f32 %v1270, %v1271
          %v1273 = vsel %vm1039, %v1244, 0.0
          %v1274 = vadd.f32 %v1272, %v1273
          %v1275 = vsel %vm1039, %v1245, 0.0
          %v1276 = vadd.f32 %v1274, %v1275
          %1277 = vadd.xlane.f32.xlu0 %v1276
          %v1278 = vpop.xlane.xlu0 %1277
          %v1279 = vrot.slane %v1278, 4
          %v1280 = vadd.f32 %v1278, %v1279
          %v1281 = vrot.slane %v1280, 2
          %v1282 = vadd.f32 %v1280, %v1281
          %v1283 = vrot.slane %v1282, 1
          %v1284 = vadd.f32 %v1282, %v1283
          %s1285 = vtos %v1284
          %v1286 = vld [vmem:[#allocation3] sm:$0xff]
          %v1287 = vld [vmem:[#allocation3 + $0x8] sm:$0xff]
          %v1288 = vld [vmem:[#allocation3 + $0x10] sm:$0xff]
          %v1289 = vld [vmem:[#allocation3 + $0x18] sm:$0xff]
          %v1290 = vld [vmem:[#allocation3 + $0x20] sm:$0xff]
          %v1291 = vld [vmem:[#allocation3 + $0x28] sm:$0xff]
          %v1292 = vld [vmem:[#allocation3 + $0x30] sm:$0xff]
          %v1293 = vld [vmem:[#allocation3 + $0x38] sm:$0xff]
          %v1294 = vld [vmem:[#allocation3 + $0x40] sm:$0xff]
          %v1295 = vld [vmem:[#allocation3 + $0x48] sm:$0xff]
          %v1296 = vld [vmem:[#allocation3 + $0x50] sm:$0xff]
          %v1297 = vld [vmem:[#allocation3 + $0x58] sm:$0xff]
          %v1298 = vld [vmem:[#allocation3 + $0x60] sm:$0xff]
          %v1299 = vld [vmem:[#allocation3 + $0x68] sm:$0xff]
          %v1300 = vld [vmem:[#allocation3 + $0x70] sm:$0xff]
          %v1301 = vld [vmem:[#allocation3 + $0x78] sm:$0xff]
          %v1302 = vsel %vm1039, %v1286, 0.0
          %v1303 = vsel %vm1039, %v1287, 0.0
          %v1304 = vadd.f32 %v1302, %v1303
          %v1305 = vsel %vm1039, %v1288, 0.0
          %v1306 = vadd.f32 %v1304, %v1305
          %v1307 = vsel %vm1039, %v1289, 0.0
          %v1308 = vadd.f32 %v1306, %v1307
          %v1309 = vsel %vm1039, %v1290, 0.0
          %v1310 = vadd.f32 %v1308, %v1309
          %v1311 = vsel %vm1039, %v1291, 0.0
          %v1312 = vadd.f32 %v1310, %v1311
          %v1313 = vsel %vm1039, %v1292, 0.0
          %v1314 = vadd.f32 %v1312, %v1313
          %v1315 = vsel %vm1039, %v1293, 0.0
          %v1316 = vadd.f32 %v1314, %v1315
          %v1317 = vsel %vm1039, %v1294, 0.0
          %v1318 = vadd.f32 %v1316, %v1317
          %v1319 = vsel %vm1039, %v1295, 0.0
          %v1320 = vadd.f32 %v1318, %v1319
          %v1321 = vsel %vm1039, %v1296, 0.0
          %v1322 = vadd.f32 %v1320, %v1321
          %v1323 = vsel %vm1039, %v1297, 0.0
          %v1324 = vadd.f32 %v1322, %v1323
          %v1325 = vsel %vm1039, %v1298, 0.0
          %v1326 = vadd.f32 %v1324, %v1325
          %v1327 = vsel %vm1039, %v1299, 0.0
          %v1328 = vadd.f32 %v1326, %v1327
          %v1329 = vsel %vm1039, %v1300, 0.0
          %v1330 = vadd.f32 %v1328, %v1329
          %v1331 = vsel %vm1039, %v1301, 0.0
          %v1332 = vadd.f32 %v1330, %v1331
          %1333 = vadd.xlane.f32.xlu0 %v1332
          %v1334 = vpop.xlane.xlu0 %1333
          %v1335 = vrot.slane %v1334, 4
          %v1336 = vadd.f32 %v1334, %v1335
          %v1337 = vrot.slane %v1336, 2
          %v1338 = vadd.f32 %v1336, %v1337
          %v1339 = vrot.slane %v1338, 1
          %v1340 = vadd.f32 %v1338, %v1339
          %s1341 = vtos %v1340
          %s1342 = sadd.f32 %s1229, %s1215
          %vm1343 = vcmp.eq.s32.totalorder %v718, 0
          %vm1344 = vcmp.eq.s32.totalorder %v718, 1
          %vm1345 = vcmp.eq.s32.totalorder %v718, 2
          %vm1346 = vcmp.eq.s32.totalorder %v718, 3
          %v1347 = vstv %s1342
          %v1348 = vsel %vm1346, %v1347, 0.0
          %v1349 = vstv %s1204
          %v1350 = vsel %vm1345, %v1349, %v1348
          %v1351 = vstv %s1341
          %v1352 = vsel %vm1344, %v1351, %v1350
          %v1353 = vstv %s1285
          %v1354 = vsel %vm1343, %v1353, %v1352
          %1355 = vst [vmem:[%s407] sm:$0xff] %v1354
        $region56: #{tpu_custom_call.1} parent=47 // pred_fallthru
          _
        %s1356 = sand.u32 %s240, 1
        %s1357 = scalar_lea.sflag [#allocation5], %s1356
        %s1358 = sand.u32 %s240, 1
        %s1359 = smul.addr %s1358, 8
        %s1360 = scalar_lea.vmem [#allocation4], %s1359
        // Predicated region
        $region57: #{tpu_custom_call.1} parent=47 // pred_check
          %p1361 = pneg %p250
        $region58: #{tpu_custom_call.1} parent=47 // pred_check_branch
          %1363 = sbr.rel (%p1361) target = $region60
        $region59: #{tpu_custom_call.1} parent=47 // pred_region
          %s1365 = ssub.s32 128, 128
          %1366 = vsyncadd %s1357, %s1365
          %s1367 = sadd.s32 %s27, %s26
          %s1368 = smul.addr %s1367, 128
          %s1369 = scalar_lea.hbm %s7, %s1368
          %s1371 = sshll.u32 %s1360, 4
          %s1372 = int_to_ptr.vmem [resolvable:$true] %s1371
          %1374 = dma.vmem_to_hbm [thread:$0]  %s1372, 128, %s1369, %s1357
        $region60: #{tpu_custom_call.1} parent=47 // pred_fallthru
          _
      $region48: #{tpu_custom_call.1} parent=5 // pred_fallthru
        _
      %p1375 = scmp.le.s32.totalorder 2, %s16
      // Predicated region
      $region61: #{tpu_custom_call.1} parent=5 // pred_check
        %p1376 = pneg %p1375
      $region62: #{tpu_custom_call.1} parent=5 // pred_check_branch
        %1378 = sbr.rel (%p1376) target = $region64
      $region63: #{tpu_custom_call.1} parent=5 // pred_region
        %s1379 = ssub.s32 %s16, 2
        // Predicated region
        $region65: #{tpu_custom_call.1} parent=63 // pred_check
          %p1380 = pneg %p256
        $region66: #{tpu_custom_call.1} parent=63 // pred_check_branch
          %1382 = sbr.rel (%p1380) target = $region68
        $region67: #{tpu_custom_call.1} parent=63 // pred_region
          %s1383 = sand.u32 %s241, 1
          %s1384 = scalar_lea.sflag [#allocation5], %s1383
          %s1385 = sand.u32 %s241, 1
          %s1386 = smul.addr %s1385, 8
          %s1387 = scalar_lea.vmem [#allocation4], %s1386
          %1388 = dma.done %s1384, 128
        $region68: #{tpu_custom_call.1} parent=63 // pred_fallthru
          _
      $region64: #{tpu_custom_call.1} parent=5 // pred_fallthru
        _
    $region6: #{tpu_custom_call.1} parent=1 // loop_footer
      %s20 = sadd.s32 1, %s16
    $region7: #{tpu_custom_call.1} parent=1 // loop_footer_branch
      %15 = sbr.rel target = $region3
    $region8: #{tpu_custom_call.1} parent=1 // loop_exit
      _
    %1389 = vsyncpa [#allocation5], 1
    %s1390 = scalar_lea.sflag [#allocation5], 1
    %1391 = vsyncpa %s1390, 1

</llo_original>
